<compile_context>
chip_gen: v7x
topology: tpu7x:2x2x1
jax: 0.10.0
libtpu: 0.0.40
codegen_flags: <defaults>
</compile_context>

<pallas_src>
import functools

import jax
import jax.numpy as jnp
import numpy as np
from jax.experimental import pallas as pl
from jax.experimental.pallas import tpu as pltpu

KSIZE = 7
PAD = 3


def _round_up(n, m):
    return (n + m - 1) // m * m


def sa_kernel(w_ref, x_ref, o_ref, mscr_ref, plane_ref, *, rem):
    # w_ref    : SMEM (49,) f32           -- 7x7 conv taps, row-major
    # x_ref    : VMEM (tc, H, W)          -- one channel tile of one batch element (unpadded)
    # o_ref    : VMEM (1, H_out, W_out)   -- lane-dense output tile (W_out % 128 == 0)
    # mscr_ref : VMEM (H, W) f32 scratch  -- running channel max (always written at (0,0))
    # plane_ref: VMEM (Hp, Wp) f32 scratch-- zero-bordered conv plane (epilogue only)
    c = pl.program_id(1)
    n_c = pl.num_programs(1)
    H, W = mscr_ref.shape
    _, H_out, W_out = o_ref.shape

    def accumulate(blk_max):
        @pl.when(c == 0)
        def _():
            mscr_ref[...] = blk_max

        @pl.when(c != 0)
        def _():
            mscr_ref[...] = jnp.maximum(mscr_ref[...], blk_max)

    # 1) channel-wise max of this tile (VPU), cast once to f32, accumulate.
    if rem == 0:
        accumulate(jnp.max(x_ref[...], axis=0).astype(jnp.float32))
    else:
        # Tail tile: only the first `rem` channels are valid (static slice),
        # so out-of-bounds DMA garbage never touches the running max.
        @pl.when(c != n_c - 1)
        def _():
            accumulate(jnp.max(x_ref[...], axis=0).astype(jnp.float32))

        @pl.when(c == n_c - 1)
        def _():
            accumulate(jnp.max(x_ref[:rem], axis=0).astype(jnp.float32))

    # 2) zero the conv plane once per batch; its zero border is the conv's
    #    padding=3 and its zero lane filler is harmless (sliced off outside).
    @pl.when(c == 0)
    def _():
        plane_ref[...] = jnp.zeros_like(plane_ref)

    # 3) once-per-batch epilogue: paste interior, 7x7 conv (49 taps), sigmoid.
    @pl.when(c == n_c - 1)
    def _():
        # The only offset (non-(0,0)) store in the kernel -- once per batch.
        plane_ref[PAD:PAD + H, PAD:PAD + W] = mscr_ref[...]

        # Hoist the 49 SMEM tap reads above the MAC loop.
        taps = [[w_ref[ki * KSIZE + kj] for kj in range(KSIZE)]
                for ki in range(KSIZE)]

        acc = jnp.zeros((H_out, W_out), jnp.float32)
        for ki in range(KSIZE):
            for kj in range(KSIZE):
                # Shifted window read directly from the VMEM plane ref (static
                # slice); no lane-slicing of live values on the VALU path.
                win = plane_ref[ki:ki + H_out, kj:kj + W_out]
                acc = acc + taps[ki][kj] * win
        o_ref[0] = jax.nn.sigmoid(acc).astype(o_ref.dtype)


def sa_forward(x, weight):
    """x: (B, C, H, W); weight: (7, 7) f32 -> (B, 1, H, W) in x.dtype."""
    B, C, H, W = x.shape
    itemsize = jnp.dtype(x.dtype).itemsize

    # Lane/sublane-dense output extents; the conv plane carries the 3-wide halo.
    H_out = _round_up(H, 8)
    W_out = _round_up(W, 128)
    Hp = _round_up(H_out + 2 * PAD, 8)
    Wp = _round_up(W_out + 2 * PAD, 128)

    # Channel tile: cap each (double-buffered) input DMA buffer at ~3 MiB so the
    # pipeline fits v5e's 16 MiB scoped VMEM and v7x's 64 MiB physical VMEM.
    per_channel_bytes = H * W * itemsize
    tc = int(max(1, min(C, (3 * 1024 * 1024) // max(per_channel_bytes, 1))))
    n_c = pl.cdiv(C, tc)
    rem = C % tc  # 0 => all tiles full; else last tile has `rem` valid channels

    w_flat = jnp.asarray(weight, jnp.float32).reshape(-1)  # (49,)

    cost = pl.CostEstimate(
        flops=int(B * (C * H * W + 2 * KSIZE * KSIZE * H_out * W_out)),
        transcendentals=int(B * H_out * W_out),
        bytes_accessed=int(B * C * H * W * itemsize
                           + B * H_out * W_out * itemsize),
    )

    out = pl.pallas_call(
        functools.partial(sa_kernel, rem=rem),
        out_shape=jax.ShapeDtypeStruct((B, 1, H_out, W_out), x.dtype),
        grid=(B, n_c),
        in_specs=[
            pl.BlockSpec(memory_space=pltpu.MemorySpace.SMEM),          # conv taps
            pl.BlockSpec((pl.Squeezed(), tc, H, W),                     # unpadded x
                         lambda b, c: (b, c, 0, 0)),
        ],
        out_specs=pl.BlockSpec((pl.Squeezed(), 1, H_out, W_out),
                               lambda b, c: (b, 0, 0, 0)),
        scratch_shapes=[
            pltpu.VMEM((H, W), jnp.float32),    # running channel max (dense path)
            pltpu.VMEM((Hp, Wp), jnp.float32),  # zero-bordered conv plane
        ],
        compiler_params=pltpu.CompilerParams(
            dimension_semantics=("parallel", "arbitrary"),
            vmem_limit_bytes=32 * 1024 * 1024,
        ),
        cost_estimate=cost,
    )(w_flat, x)

    return out[:, :, :H, :W]


def sa_reference(x, weight):
    """Pure-JAX reference matching the PyTorch forward."""
    max_out = jnp.max(x, axis=1, keepdims=True)  # (B,1,H,W)
    out = jax.lax.conv_general_dilated(
        max_out.astype(jnp.float32),
        weight.reshape(1, 1, KSIZE, KSIZE).astype(jnp.float32),
        window_strides=(1, 1),
        padding=((PAD, PAD), (PAD, PAD)),
        dimension_numbers=("NCHW", "OIHW", "NCHW"),
    )
    return jax.nn.sigmoid(out).astype(x.dtype)


if __name__ == "__main__":
    key = jax.random.PRNGKey(0)
    kx, kw = jax.random.split(key)

    B, C, H, W = 2, 4, 16, 16
    x = jax.random.normal(kx, (B, C, H, W), dtype=jnp.float32)

    # Conv2d(1,1,7,bias=False) weight, Kaiming-uniform-style bound 1/sqrt(fan_in).
    bound = 1.0 / np.sqrt(KSIZE * KSIZE)
    weight = jax.random.uniform(kw, (KSIZE, KSIZE), dtype=jnp.float32,
                                minval=-bound, maxval=bound)

    out = jax.block_until_ready(sa_forward(x, weight))
    ref = jax.block_until_ready(sa_reference(x, weight))

    assert out.shape == (B, 1, H, W)
    np.testing.assert_allclose(np.asarray(out), np.asarray(ref),
                               rtol=1e-5, atol=1e-5)

    print("KERNEL_OK")
</pallas_src>

<mosaic_0001>
module attributes {stable_mosaic.version = 11 : i64} {
  func.func @sa_kernel(%arg0: i32, %arg1: i32, %arg2: memref<49xf32, #tpu.memory_space<smem>>, %arg3: memref<1x4x16x16xf32, #tpu.memory_space<vmem>>, %arg4: memref<1x1x16x128xf32, #tpu.memory_space<vmem>>, %arg5: memref<16x16xf32, #tpu.memory_space<vmem>>, %arg6: memref<24x256xf32, #tpu.memory_space<vmem>>) attributes {dimension_semantics = [#tpu.dimension_semantics<parallel>, #tpu.dimension_semantics<arbitrary>], iteration_bounds = array<i64: 2, 1>, scalar_prefetch = 0 : i64, scratch_operands = 2 : i64, tpu.core_type = #tpu.core_type<tc>, window_params = [{transform_indices = @transform_0, window_bounds = array<i64: 49>}, {transform_indices = @transform_1, window_bounds = array<i64: 1, 4, 16, 16>}, {transform_indices = @transform_2, window_bounds = array<i64: 1, 1, 16, 128>}]} {
    %c0 = arith.constant 0 : index
    %c0_0 = arith.constant 0 : index
    %c0_1 = arith.constant 0 : index
    %c0_2 = arith.constant 0 : index
    %0 = vector.load %arg3[%c0, %c0_0, %c0_1, %c0_2] : memref<1x4x16x16xf32, #tpu.memory_space<vmem>>, vector<1x4x16x16xf32>
    %1 = vector.shape_cast %0 : vector<1x4x16x16xf32> to vector<4x16x16xf32>
    %cst = arith.constant dense<0xFF800000> : vector<16x16xf32>
    %2 = vector.multi_reduction <maximumf>, %1, %cst [0] : vector<4x16x16xf32> to vector<16x16xf32>
    %c0_i32 = arith.constant 0 : i32
    %3 = arith.cmpi eq, %arg1, %c0_i32 : i32
    %4 = arith.extui %3 : i1 to i32
    %c0_i32_3 = arith.constant 0 : i32
    %5 = arith.cmpi ne, %4, %c0_i32_3 : i32
    scf.if %5 {
      %c0_10 = arith.constant 0 : index
      %c0_11 = arith.constant 0 : index
      %15 = vector.load %arg5[%c0_10, %c0_11] : memref<16x16xf32, #tpu.memory_space<vmem>>, vector<16x16xf32>
      tpu.vector_store %arg5[%c0_10, %c0_11], %2 {strides = array<i32>} : memref<16x16xf32, #tpu.memory_space<vmem>>, vector<16x16xf32>,
    } else {
    }
    %c0_i32_4 = arith.constant 0 : i32
    %6 = arith.cmpi ne, %arg1, %c0_i32_4 : i32
    %7 = arith.extui %6 : i1 to i32
    %c0_i32_5 = arith.constant 0 : i32
    %8 = arith.cmpi ne, %7, %c0_i32_5 : i32
    scf.if %8 {
      %c0_10 = arith.constant 0 : index
      %c0_11 = arith.constant 0 : index
      %15 = vector.load %arg5[%c0_10, %c0_11] : memref<16x16xf32, #tpu.memory_space<vmem>>, vector<16x16xf32>
      %16 = arith.maximumf %15, %2 : vector<16x16xf32>
      %c0_12 = arith.constant 0 : index
      %c0_13 = arith.constant 0 : index
      %17 = vector.load %arg5[%c0_12, %c0_13] : memref<16x16xf32, #tpu.memory_space<vmem>>, vector<16x16xf32>
      tpu.vector_store %arg5[%c0_12, %c0_13], %16 {strides = array<i32>} : memref<16x16xf32, #tpu.memory_space<vmem>>, vector<16x16xf32>,
    } else {
    }
    %c0_i32_6 = arith.constant 0 : i32
    %9 = arith.cmpi eq, %arg1, %c0_i32_6 : i32
    %10 = arith.extui %9 : i1 to i32
    %c0_i32_7 = arith.constant 0 : i32
    %11 = arith.cmpi ne, %10, %c0_i32_7 : i32
    scf.if %11 {
      %cst_10 = arith.constant 0.000000e+00 : f32
      %15 = vector.broadcast %cst_10 : f32 to vector<24x256xf32>
      %c0_11 = arith.constant 0 : index
      %c0_12 = arith.constant 0 : index
      %16 = vector.load %arg6[%c0_11, %c0_12] : memref<24x256xf32, #tpu.memory_space<vmem>>, vector<24x256xf32>
      tpu.vector_store %arg6[%c0_11, %c0_12], %15 {strides = array<i32>} : memref<24x256xf32, #tpu.memory_space<vmem>>, vector<24x256xf32>,
    } else {
    }
    %c0_i32_8 = arith.constant 0 : i32
    %12 = arith.cmpi eq, %arg1, %c0_i32_8 : i32
    %13 = arith.extui %12 : i1 to i32
    %c0_i32_9 = arith.constant 0 : i32
    %14 = arith.cmpi ne, %13, %c0_i32_9 : i32
    scf.if %14 {
      %c0_10 = arith.constant 0 : index
      %c0_11 = arith.constant 0 : index
      %15 = vector.load %arg5[%c0_10, %c0_11] : memref<16x16xf32, #tpu.memory_space<vmem>>, vector<16x16xf32>
      %c3 = arith.constant 3 : index
      %c3_12 = arith.constant 3 : index
      %16 = vector.load %arg6[%c3, %c3_12] : memref<24x256xf32, #tpu.memory_space<vmem>>, vector<16x16xf32>
      tpu.vector_store %arg6[%c3, %c3_12], %15 {strides = array<i32>} : memref<24x256xf32, #tpu.memory_space<vmem>>, vector<16x16xf32>,
      %c0_13 = arith.constant 0 : index
      %17 = memref.load %arg2[%c0_13] : memref<49xf32, #tpu.memory_space<smem>>
      %c1 = arith.constant 1 : index
      %18 = memref.load %arg2[%c1] : memref<49xf32, #tpu.memory_space<smem>>
      %c2 = arith.constant 2 : index
      %19 = memref.load %arg2[%c2] : memref<49xf32, #tpu.memory_space<smem>>
      %c3_14 = arith.constant 3 : index
      %20 = memref.load %arg2[%c3_14] : memref<49xf32, #tpu.memory_space<smem>>
      %c4 = arith.constant 4 : index
      %21 = memref.load %arg2[%c4] : memref<49xf32, #tpu.memory_space<smem>>
      %c5 = arith.constant 5 : index
      %22 = memref.load %arg2[%c5] : memref<49xf32, #tpu.memory_space<smem>>
      %c6 = arith.constant 6 : index
      %23 = memref.load %arg2[%c6] : memref<49xf32, #tpu.memory_space<smem>>
      %c7 = arith.constant 7 : index
      %24 = memref.load %arg2[%c7] : memref<49xf32, #tpu.memory_space<smem>>
      %c8 = arith.constant 8 : index
      %25 = memref.load %arg2[%c8] : memref<49xf32, #tpu.memory_space<smem>>
      %c9 = arith.constant 9 : index
      %26 = memref.load %arg2[%c9] : memref<49xf32, #tpu.memory_space<smem>>
      %c10 = arith.constant 10 : index
      %27 = memref.load %arg2[%c10] : memref<49xf32, #tpu.memory_space<smem>>
      %c11 = arith.constant 11 : index
      %28 = memref.load %arg2[%c11] : memref<49xf32, #tpu.memory_space<smem>>
      %c12 = arith.constant 12 : index
      %29 = memref.load %arg2[%c12] : memref<49xf32, #tpu.memory_space<smem>>
      %c13 = arith.constant 13 : index
      %30 = memref.load %arg2[%c13] : memref<49xf32, #tpu.memory_space<smem>>
      %c14 = arith.constant 14 : index
      %31 = memref.load %arg2[%c14] : memref<49xf32, #tpu.memory_space<smem>>
      %c15 = arith.constant 15 : index
      %32 = memref.load %arg2[%c15] : memref<49xf32, #tpu.memory_space<smem>>
      %c16 = arith.constant 16 : index
      %33 = memref.load %arg2[%c16] : memref<49xf32, #tpu.memory_space<smem>>
      %c17 = arith.constant 17 : index
      %34 = memref.load %arg2[%c17] : memref<49xf32, #tpu.memory_space<smem>>
      %c18 = arith.constant 18 : index
      %35 = memref.load %arg2[%c18] : memref<49xf32, #tpu.memory_space<smem>>
      %c19 = arith.constant 19 : index
      %36 = memref.load %arg2[%c19] : memref<49xf32, #tpu.memory_space<smem>>
      %c20 = arith.constant 20 : index
      %37 = memref.load %arg2[%c20] : memref<49xf32, #tpu.memory_space<smem>>
      %c21 = arith.constant 21 : index
      %38 = memref.load %arg2[%c21] : memref<49xf32, #tpu.memory_space<smem>>
      %c22 = arith.constant 22 : index
      %39 = memref.load %arg2[%c22] : memref<49xf32, #tpu.memory_space<smem>>
      %c23 = arith.constant 23 : index
      %40 = memref.load %arg2[%c23] : memref<49xf32, #tpu.memory_space<smem>>
      %c24 = arith.constant 24 : index
      %41 = memref.load %arg2[%c24] : memref<49xf32, #tpu.memory_space<smem>>
      %c25 = arith.constant 25 : index
      %42 = memref.load %arg2[%c25] : memref<49xf32, #tpu.memory_space<smem>>
      %c26 = arith.constant 26 : index
      %43 = memref.load %arg2[%c26] : memref<49xf32, #tpu.memory_space<smem>>
      %c27 = arith.constant 27 : index
      %44 = memref.load %arg2[%c27] : memref<49xf32, #tpu.memory_space<smem>>
      %c28 = arith.constant 28 : index
      %45 = memref.load %arg2[%c28] : memref<49xf32, #tpu.memory_space<smem>>
      %c29 = arith.constant 29 : index
      %46 = memref.load %arg2[%c29] : memref<49xf32, #tpu.memory_space<smem>>
      %c30 = arith.constant 30 : index
      %47 = memref.load %arg2[%c30] : memref<49xf32, #tpu.memory_space<smem>>
      %c31 = arith.constant 31 : index
      %48 = memref.load %arg2[%c31] : memref<49xf32, #tpu.memory_space<smem>>
      %c32 = arith.constant 32 : index
      %49 = memref.load %arg2[%c32] : memref<49xf32, #tpu.memory_space<smem>>
      %c33 = arith.constant 33 : index
      %50 = memref.load %arg2[%c33] : memref<49xf32, #tpu.memory_space<smem>>
      %c34 = arith.constant 34 : index
      %51 = memref.load %arg2[%c34] : memref<49xf32, #tpu.memory_space<smem>>
      %c35 = arith.constant 35 : index
      %52 = memref.load %arg2[%c35] : memref<49xf32, #tpu.memory_space<smem>>
      %c36 = arith.constant 36 : index
      %53 = memref.load %arg2[%c36] : memref<49xf32, #tpu.memory_space<smem>>
      %c37 = arith.constant 37 : index
      %54 = memref.load %arg2[%c37] : memref<49xf32, #tpu.memory_space<smem>>
      %c38 = arith.constant 38 : index
      %55 = memref.load %arg2[%c38] : memref<49xf32, #tpu.memory_space<smem>>
      %c39 = arith.constant 39 : index
      %56 = memref.load %arg2[%c39] : memref<49xf32, #tpu.memory_space<smem>>
      %c40 = arith.constant 40 : index
      %57 = memref.load %arg2[%c40] : memref<49xf32, #tpu.memory_space<smem>>
      %c41 = arith.constant 41 : index
      %58 = memref.load %arg2[%c41] : memref<49xf32, #tpu.memory_space<smem>>
      %c42 = arith.constant 42 : index
      %59 = memref.load %arg2[%c42] : memref<49xf32, #tpu.memory_space<smem>>
      %c43 = arith.constant 43 : index
      %60 = memref.load %arg2[%c43] : memref<49xf32, #tpu.memory_space<smem>>
      %c44 = arith.constant 44 : index
      %61 = memref.load %arg2[%c44] : memref<49xf32, #tpu.memory_space<smem>>
      %c45 = arith.constant 45 : index
      %62 = memref.load %arg2[%c45] : memref<49xf32, #tpu.memory_space<smem>>
      %c46 = arith.constant 46 : index
      %63 = memref.load %arg2[%c46] : memref<49xf32, #tpu.memory_space<smem>>
      %c47 = arith.constant 47 : index
      %64 = memref.load %arg2[%c47] : memref<49xf32, #tpu.memory_space<smem>>
      %c48 = arith.constant 48 : index
      %65 = memref.load %arg2[%c48] : memref<49xf32, #tpu.memory_space<smem>>
      %cst_15 = arith.constant 0.000000e+00 : f32
      %66 = vector.broadcast %cst_15 : f32 to vector<16x128xf32>
      %c0_16 = arith.constant 0 : index
      %c0_17 = arith.constant 0 : index
      %67 = vector.load %arg6[%c0_16, %c0_17] : memref<24x256xf32, #tpu.memory_space<vmem>>, vector<16x128xf32>
      %68 = vector.broadcast %17 : f32 to vector<16x128xf32>
      %69 = arith.mulf %68, %67 : vector<16x128xf32>
      %70 = arith.addf %66, %69 : vector<16x128xf32>
      %c0_18 = arith.constant 0 : index
      %c1_19 = arith.constant 1 : index
      %71 = vector.load %arg6[%c0_18, %c1_19] : memref<24x256xf32, #tpu.memory_space<vmem>>, vector<16x128xf32>
      %72 = vector.broadcast %18 : f32 to vector<16x128xf32>
      %73 = arith.mulf %72, %71 : vector<16x128xf32>
      %74 = arith.addf %70, %73 : vector<16x128xf32>
      %c0_20 = arith.constant 0 : index
      %c2_21 = arith.constant 2 : index
      %75 = vector.load %arg6[%c0_20, %c2_21] : memref<24x256xf32, #tpu.memory_space<vmem>>, vector<16x128xf32>
      %76 = vector.broadcast %19 : f32 to vector<16x128xf32>
      %77 = arith.mulf %76, %75 : vector<16x128xf32>
      %78 = arith.addf %74, %77 : vector<16x128xf32>
      %c0_22 = arith.constant 0 : index
      %c3_23 = arith.constant 3 : index
      %79 = vector.load %arg6[%c0_22, %c3_23] : memref<24x256xf32, #tpu.memory_space<vmem>>, vector<16x128xf32>
      %80 = vector.broadcast %20 : f32 to vector<16x128xf32>
      %81 = arith.mulf %80, %79 : vector<16x128xf32>
      %82 = arith.addf %78, %81 : vector<16x128xf32>
      %c0_24 = arith.constant 0 : index
      %c4_25 = arith.constant 4 : index
      %83 = vector.load %arg6[%c0_24, %c4_25] : memref<24x256xf32, #tpu.memory_space<vmem>>, vector<16x128xf32>
      %84 = vector.broadcast %21 : f32 to vector<16x128xf32>
      %85 = arith.mulf %84, %83 : vector<16x128xf32>
      %86 = arith.addf %82, %85 : vector<16x128xf32>
      %c0_26 = arith.constant 0 : index
      %c5_27 = arith.constant 5 : index
      %87 = vector.load %arg6[%c0_26, %c5_27] : memref<24x256xf32, #tpu.memory_space<vmem>>, vector<16x128xf32>
      %88 = vector.broadcast %22 : f32 to vector<16x128xf32>
      %89 = arith.mulf %88, %87 : vector<16x128xf32>
      %90 = arith.addf %86, %89 : vector<16x128xf32>
      %c0_28 = arith.constant 0 : index
      %c6_29 = arith.constant 6 : index
      %91 = vector.load %arg6[%c0_28, %c6_29] : memref<24x256xf32, #tpu.memory_space<vmem>>, vector<16x128xf32>
      %92 = vector.broadcast %23 : f32 to vector<16x128xf32>
      %93 = arith.mulf %92, %91 : vector<16x128xf32>
      %94 = arith.addf %90, %93 : vector<16x128xf32>
      %c1_30 = arith.constant 1 : index
      %c0_31 = arith.constant 0 : index
      %95 = vector.load %arg6[%c1_30, %c0_31] : memref<24x256xf32, #tpu.memory_space<vmem>>, vector<16x128xf32>
      %96 = vector.broadcast %24 : f32 to vector<16x128xf32>
      %97 = arith.mulf %96, %95 : vector<16x128xf32>
      %98 = arith.addf %94, %97 : vector<16x128xf32>
      %c1_32 = arith.constant 1 : index
      %c1_33 = arith.constant 1 : index
      %99 = vector.load %arg6[%c1_32, %c1_33] : memref<24x256xf32, #tpu.memory_space<vmem>>, vector<16x128xf32>
      %100 = vector.broadcast %25 : f32 to vector<16x128xf32>
      %101 = arith.mulf %100, %99 : vector<16x128xf32>
      %102 = arith.addf %98, %101 : vector<16x128xf32>
      %c1_34 = arith.constant 1 : index
      %c2_35 = arith.constant 2 : index
      %103 = vector.load %arg6[%c1_34, %c2_35] : memref<24x256xf32, #tpu.memory_space<vmem>>, vector<16x128xf32>
      %104 = vector.broadcast %26 : f32 to vector<16x128xf32>
      %105 = arith.mulf %104, %103 : vector<16x128xf32>
      %106 = arith.addf %102, %105 : vector<16x128xf32>
      %c1_36 = arith.constant 1 : index
      %c3_37 = arith.constant 3 : index
      %107 = vector.load %arg6[%c1_36, %c3_37] : memref<24x256xf32, #tpu.memory_space<vmem>>, vector<16x128xf32>
      %108 = vector.broadcast %27 : f32 to vector<16x128xf32>
      %109 = arith.mulf %108, %107 : vector<16x128xf32>
      %110 = arith.addf %106, %109 : vector<16x128xf32>
      %c1_38 = arith.constant 1 : index
      %c4_39 = arith.constant 4 : index
      %111 = vector.load %arg6[%c1_38, %c4_39] : memref<24x256xf32, #tpu.memory_space<vmem>>, vector<16x128xf32>
      %112 = vector.broadcast %28 : f32 to vector<16x128xf32>
      %113 = arith.mulf %112, %111 : vector<16x128xf32>
      %114 = arith.addf %110, %113 : vector<16x128xf32>
      %c1_40 = arith.constant 1 : index
      %c5_41 = arith.constant 5 : index
      %115 = vector.load %arg6[%c1_40, %c5_41] : memref<24x256xf32, #tpu.memory_space<vmem>>, vector<16x128xf32>
      %116 = vector.broadcast %29 : f32 to vector<16x128xf32>
      %117 = arith.mulf %116, %115 : vector<16x128xf32>
      %118 = arith.addf %114, %117 : vector<16x128xf32>
      %c1_42 = arith.constant 1 : index
      %c6_43 = arith.constant 6 : index
      %119 = vector.load %arg6[%c1_42, %c6_43] : memref<24x256xf32, #tpu.memory_space<vmem>>, vector<16x128xf32>
      %120 = vector.broadcast %30 : f32 to vector<16x128xf32>
      %121 = arith.mulf %120, %119 : vector<16x128xf32>
      %122 = arith.addf %118, %121 : vector<16x128xf32>
      %c2_44 = arith.constant 2 : index
      %c0_45 = arith.constant 0 : index
      %123 = vector.load %arg6[%c2_44, %c0_45] : memref<24x256xf32, #tpu.memory_space<vmem>>, vector<16x128xf32>
      %124 = vector.broadcast %31 : f32 to vector<16x128xf32>
      %125 = arith.mulf %124, %123 : vector<16x128xf32>
      %126 = arith.addf %122, %125 : vector<16x128xf32>
      %c2_46 = arith.constant 2 : index
      %c1_47 = arith.constant 1 : index
      %127 = vector.load %arg6[%c2_46, %c1_47] : memref<24x256xf32, #tpu.memory_space<vmem>>, vector<16x128xf32>
      %128 = vector.broadcast %32 : f32 to vector<16x128xf32>
      %129 = arith.mulf %128, %127 : vector<16x128xf32>
      %130 = arith.addf %126, %129 : vector<16x128xf32>
      %c2_48 = arith.constant 2 : index
      %c2_49 = arith.constant 2 : index
      %131 = vector.load %arg6[%c2_48, %c2_49] : memref<24x256xf32, #tpu.memory_space<vmem>>, vector<16x128xf32>
      %132 = vector.broadcast %33 : f32 to vector<16x128xf32>
      %133 = arith.mulf %132, %131 : vector<16x128xf32>
      %134 = arith.addf %130, %133 : vector<16x128xf32>
      %c2_50 = arith.constant 2 : index
      %c3_51 = arith.constant 3 : index
      %135 = vector.load %arg6[%c2_50, %c3_51] : memref<24x256xf32, #tpu.memory_space<vmem>>, vector<16x128xf32>
      %136 = vector.broadcast %34 : f32 to vector<16x128xf32>
      %137 = arith.mulf %136, %135 : vector<16x128xf32>
      %138 = arith.addf %134, %137 : vector<16x128xf32>
      %c2_52 = arith.constant 2 : index
      %c4_53 = arith.constant 4 : index
      %139 = vector.load %arg6[%c2_52, %c4_53] : memref<24x256xf32, #tpu.memory_space<vmem>>, vector<16x128xf32>
      %140 = vector.broadcast %35 : f32 to vector<16x128xf32>
      %141 = arith.mulf %140, %139 : vector<16x128xf32>
      %142 = arith.addf %138, %141 : vector<16x128xf32>
      %c2_54 = arith.constant 2 : index
      %c5_55 = arith.constant 5 : index
      %143 = vector.load %arg6[%c2_54, %c5_55] : memref<24x256xf32, #tpu.memory_space<vmem>>, vector<16x128xf32>
      %144 = vector.broadcast %36 : f32 to vector<16x128xf32>
      %145 = arith.mulf %144, %143 : vector<16x128xf32>
      %146 = arith.addf %142, %145 : vector<16x128xf32>
      %c2_56 = arith.constant 2 : index
      %c6_57 = arith.constant 6 : index
      %147 = vector.load %arg6[%c2_56, %c6_57] : memref<24x256xf32, #tpu.memory_space<vmem>>, vector<16x128xf32>
      %148 = vector.broadcast %37 : f32 to vector<16x128xf32>
      %149 = arith.mulf %148, %147 : vector<16x128xf32>
      %150 = arith.addf %146, %149 : vector<16x128xf32>
      %c3_58 = arith.constant 3 : index
      %c0_59 = arith.constant 0 : index
      %151 = vector.load %arg6[%c3_58, %c0_59] : memref<24x256xf32, #tpu.memory_space<vmem>>, vector<16x128xf32>
      %152 = vector.broadcast %38 : f32 to vector<16x128xf32>
      %153 = arith.mulf %152, %151 : vector<16x128xf32>
      %154 = arith.addf %150, %153 : vector<16x128xf32>
      %c3_60 = arith.constant 3 : index
      %c1_61 = arith.constant 1 : index
      %155 = vector.load %arg6[%c3_60, %c1_61] : memref<24x256xf32, #tpu.memory_space<vmem>>, vector<16x128xf32>
      %156 = vector.broadcast %39 : f32 to vector<16x128xf32>
      %157 = arith.mulf %156, %155 : vector<16x128xf32>
      %158 = arith.addf %154, %157 : vector<16x128xf32>
      %c3_62 = arith.constant 3 : index
      %c2_63 = arith.constant 2 : index
      %159 = vector.load %arg6[%c3_62, %c2_63] : memref<24x256xf32, #tpu.memory_space<vmem>>, vector<16x128xf32>
      %160 = vector.broadcast %40 : f32 to vector<16x128xf32>
      %161 = arith.mulf %160, %159 : vector<16x128xf32>
      %162 = arith.addf %158, %161 : vector<16x128xf32>
      %c3_64 = arith.constant 3 : index
      %c3_65 = arith.constant 3 : index
      %163 = vector.load %arg6[%c3_64, %c3_65] : memref<24x256xf32, #tpu.memory_space<vmem>>, vector<16x128xf32>
      %164 = vector.broadcast %41 : f32 to vector<16x128xf32>
      %165 = arith.mulf %164, %163 : vector<16x128xf32>
      %166 = arith.addf %162, %165 : vector<16x128xf32>
      %c3_66 = arith.constant 3 : index
      %c4_67 = arith.constant 4 : index
      %167 = vector.load %arg6[%c3_66, %c4_67] : memref<24x256xf32, #tpu.memory_space<vmem>>, vector<16x128xf32>
      %168 = vector.broadcast %42 : f32 to vector<16x128xf32>
      %169 = arith.mulf %168, %167 : vector<16x128xf32>
      %170 = arith.addf %166, %169 : vector<16x128xf32>
      %c3_68 = arith.constant 3 : index
      %c5_69 = arith.constant 5 : index
      %171 = vector.load %arg6[%c3_68, %c5_69] : memref<24x256xf32, #tpu.memory_space<vmem>>, vector<16x128xf32>
      %172 = vector.broadcast %43 : f32 to vector<16x128xf32>
      %173 = arith.mulf %172, %171 : vector<16x128xf32>
      %174 = arith.addf %170, %173 : vector<16x128xf32>
      %c3_70 = arith.constant 3 : index
      %c6_71 = arith.constant 6 : index
      %175 = vector.load %arg6[%c3_70, %c6_71] : memref<24x256xf32, #tpu.memory_space<vmem>>, vector<16x128xf32>
      %176 = vector.broadcast %44 : f32 to vector<16x128xf32>
      %177 = arith.mulf %176, %175 : vector<16x128xf32>
      %178 = arith.addf %174, %177 : vector<16x128xf32>
      %c4_72 = arith.constant 4 : index
      %c0_73 = arith.constant 0 : index
      %179 = vector.load %arg6[%c4_72, %c0_73] : memref<24x256xf32, #tpu.memory_space<vmem>>, vector<16x128xf32>
      %180 = vector.broadcast %45 : f32 to vector<16x128xf32>
      %181 = arith.mulf %180, %179 : vector<16x128xf32>
      %182 = arith.addf %178, %181 : vector<16x128xf32>
      %c4_74 = arith.constant 4 : index
      %c1_75 = arith.constant 1 : index
      %183 = vector.load %arg6[%c4_74, %c1_75] : memref<24x256xf32, #tpu.memory_space<vmem>>, vector<16x128xf32>
      %184 = vector.broadcast %46 : f32 to vector<16x128xf32>
      %185 = arith.mulf %184, %183 : vector<16x128xf32>
      %186 = arith.addf %182, %185 : vector<16x128xf32>
      %c4_76 = arith.constant 4 : index
      %c2_77 = arith.constant 2 : index
      %187 = vector.load %arg6[%c4_76, %c2_77] : memref<24x256xf32, #tpu.memory_space<vmem>>, vector<16x128xf32>
      %188 = vector.broadcast %47 : f32 to vector<16x128xf32>
      %189 = arith.mulf %188, %187 : vector<16x128xf32>
      %190 = arith.addf %186, %189 : vector<16x128xf32>
      %c4_78 = arith.constant 4 : index
      %c3_79 = arith.constant 3 : index
      %191 = vector.load %arg6[%c4_78, %c3_79] : memref<24x256xf32, #tpu.memory_space<vmem>>, vector<16x128xf32>
      %192 = vector.broadcast %48 : f32 to vector<16x128xf32>
      %193 = arith.mulf %192, %191 : vector<16x128xf32>
      %194 = arith.addf %190, %193 : vector<16x128xf32>
      %c4_80 = arith.constant 4 : index
      %c4_81 = arith.constant 4 : index
      %195 = vector.load %arg6[%c4_80, %c4_81] : memref<24x256xf32, #tpu.memory_space<vmem>>, vector<16x128xf32>
      %196 = vector.broadcast %49 : f32 to vector<16x128xf32>
      %197 = arith.mulf %196, %195 : vector<16x128xf32>
      %198 = arith.addf %194, %197 : vector<16x128xf32>
      %c4_82 = arith.constant 4 : index
      %c5_83 = arith.constant 5 : index
      %199 = vector.load %arg6[%c4_82, %c5_83] : memref<24x256xf32, #tpu.memory_space<vmem>>, vector<16x128xf32>
      %200 = vector.broadcast %50 : f32 to vector<16x128xf32>
      %201 = arith.mulf %200, %199 : vector<16x128xf32>
      %202 = arith.addf %198, %201 : vector<16x128xf32>
      %c4_84 = arith.constant 4 : index
      %c6_85 = arith.constant 6 : index
      %203 = vector.load %arg6[%c4_84, %c6_85] : memref<24x256xf32, #tpu.memory_space<vmem>>, vector<16x128xf32>
      %204 = vector.broadcast %51 : f32 to vector<16x128xf32>
      %205 = arith.mulf %204, %203 : vector<16x128xf32>
      %206 = arith.addf %202, %205 : vector<16x128xf32>
      %c5_86 = arith.constant 5 : index
      %c0_87 = arith.constant 0 : index
      %207 = vector.load %arg6[%c5_86, %c0_87] : memref<24x256xf32, #tpu.memory_space<vmem>>, vector<16x128xf32>
      %208 = vector.broadcast %52 : f32 to vector<16x128xf32>
      %209 = arith.mulf %208, %207 : vector<16x128xf32>
      %210 = arith.addf %206, %209 : vector<16x128xf32>
      %c5_88 = arith.constant 5 : index
      %c1_89 = arith.constant 1 : index
      %211 = vector.load %arg6[%c5_88, %c1_89] : memref<24x256xf32, #tpu.memory_space<vmem>>, vector<16x128xf32>
      %212 = vector.broadcast %53 : f32 to vector<16x128xf32>
      %213 = arith.mulf %212, %211 : vector<16x128xf32>
      %214 = arith.addf %210, %213 : vector<16x128xf32>
      %c5_90 = arith.constant 5 : index
      %c2_91 = arith.constant 2 : index
      %215 = vector.load %arg6[%c5_90, %c2_91] : memref<24x256xf32, #tpu.memory_space<vmem>>, vector<16x128xf32>
      %216 = vector.broadcast %54 : f32 to vector<16x128xf32>
      %217 = arith.mulf %216, %215 : vector<16x128xf32>
      %218 = arith.addf %214, %217 : vector<16x128xf32>
      %c5_92 = arith.constant 5 : index
      %c3_93 = arith.constant 3 : index
      %219 = vector.load %arg6[%c5_92, %c3_93] : memref<24x256xf32, #tpu.memory_space<vmem>>, vector<16x128xf32>
      %220 = vector.broadcast %55 : f32 to vector<16x128xf32>
      %221 = arith.mulf %220, %219 : vector<16x128xf32>
      %222 = arith.addf %218, %221 : vector<16x128xf32>
      %c5_94 = arith.constant 5 : index
      %c4_95 = arith.constant 4 : index
      %223 = vector.load %arg6[%c5_94, %c4_95] : memref<24x256xf32, #tpu.memory_space<vmem>>, vector<16x128xf32>
      %224 = vector.broadcast %56 : f32 to vector<16x128xf32>
      %225 = arith.mulf %224, %223 : vector<16x128xf32>
      %226 = arith.addf %222, %225 : vector<16x128xf32>
      %c5_96 = arith.constant 5 : index
      %c5_97 = arith.constant 5 : index
      %227 = vector.load %arg6[%c5_96, %c5_97] : memref<24x256xf32, #tpu.memory_space<vmem>>, vector<16x128xf32>
      %228 = vector.broadcast %57 : f32 to vector<16x128xf32>
      %229 = arith.mulf %228, %227 : vector<16x128xf32>
      %230 = arith.addf %226, %229 : vector<16x128xf32>
      %c5_98 = arith.constant 5 : index
      %c6_99 = arith.constant 6 : index
      %231 = vector.load %arg6[%c5_98, %c6_99] : memref<24x256xf32, #tpu.memory_space<vmem>>, vector<16x128xf32>
      %232 = vector.broadcast %58 : f32 to vector<16x128xf32>
      %233 = arith.mulf %232, %231 : vector<16x128xf32>
      %234 = arith.addf %230, %233 : vector<16x128xf32>
      %c6_100 = arith.constant 6 : index
      %c0_101 = arith.constant 0 : index
      %235 = vector.load %arg6[%c6_100, %c0_101] : memref<24x256xf32, #tpu.memory_space<vmem>>, vector<16x128xf32>
      %236 = vector.broadcast %59 : f32 to vector<16x128xf32>
      %237 = arith.mulf %236, %235 : vector<16x128xf32>
      %238 = arith.addf %234, %237 : vector<16x128xf32>
      %c6_102 = arith.constant 6 : index
      %c1_103 = arith.constant 1 : index
      %239 = vector.load %arg6[%c6_102, %c1_103] : memref<24x256xf32, #tpu.memory_space<vmem>>, vector<16x128xf32>
      %240 = vector.broadcast %60 : f32 to vector<16x128xf32>
      %241 = arith.mulf %240, %239 : vector<16x128xf32>
      %242 = arith.addf %238, %241 : vector<16x128xf32>
      %c6_104 = arith.constant 6 : index
      %c2_105 = arith.constant 2 : index
      %243 = vector.load %arg6[%c6_104, %c2_105] : memref<24x256xf32, #tpu.memory_space<vmem>>, vector<16x128xf32>
      %244 = vector.broadcast %61 : f32 to vector<16x128xf32>
      %245 = arith.mulf %244, %243 : vector<16x128xf32>
      %246 = arith.addf %242, %245 : vector<16x128xf32>
      %c6_106 = arith.constant 6 : index
      %c3_107 = arith.constant 3 : index
      %247 = vector.load %arg6[%c6_106, %c3_107] : memref<24x256xf32, #tpu.memory_space<vmem>>, vector<16x128xf32>
      %248 = vector.broadcast %62 : f32 to vector<16x128xf32>
      %249 = arith.mulf %248, %247 : vector<16x128xf32>
      %250 = arith.addf %246, %249 : vector<16x128xf32>
      %c6_108 = arith.constant 6 : index
      %c4_109 = arith.constant 4 : index
      %251 = vector.load %arg6[%c6_108, %c4_109] : memref<24x256xf32, #tpu.memory_space<vmem>>, vector<16x128xf32>
      %252 = vector.broadcast %63 : f32 to vector<16x128xf32>
      %253 = arith.mulf %252, %251 : vector<16x128xf32>
      %254 = arith.addf %250, %253 : vector<16x128xf32>
      %c6_110 = arith.constant 6 : index
      %c5_111 = arith.constant 5 : index
      %255 = vector.load %arg6[%c6_110, %c5_111] : memref<24x256xf32, #tpu.memory_space<vmem>>, vector<16x128xf32>
      %256 = vector.broadcast %64 : f32 to vector<16x128xf32>
      %257 = arith.mulf %256, %255 : vector<16x128xf32>
      %258 = arith.addf %254, %257 : vector<16x128xf32>
      %c6_112 = arith.constant 6 : index
      %c6_113 = arith.constant 6 : index
      %259 = vector.load %arg6[%c6_112, %c6_113] : memref<24x256xf32, #tpu.memory_space<vmem>>, vector<16x128xf32>
      %260 = vector.broadcast %65 : f32 to vector<16x128xf32>
      %261 = arith.mulf %260, %259 : vector<16x128xf32>
      %262 = arith.addf %258, %261 : vector<16x128xf32>
      %263 = arith.negf %262 : vector<16x128xf32>
      %264 = math.exp %263 : vector<16x128xf32>
      %cst_114 = arith.constant 1.000000e+00 : f32
      %265 = vector.broadcast %cst_114 : f32 to vector<16x128xf32>
      %266 = arith.addf %265, %264 : vector<16x128xf32>
      %267 = arith.divf %265, %266 : vector<16x128xf32>
      %c0_115 = arith.constant 0 : index
      %c0_116 = arith.constant 0 : index
      %c0_117 = arith.constant 0 : index
      %c0_118 = arith.constant 0 : index
      %268 = vector.load %arg4[%c0_115, %c0_116, %c0_117, %c0_118] : memref<1x1x16x128xf32, #tpu.memory_space<vmem>>, vector<1x1x16x128xf32>
      %269 = vector.shape_cast %268 : vector<1x1x16x128xf32> to vector<16x128xf32>
      %270 = vector.shape_cast %267 : vector<16x128xf32> to vector<1x1x16x128xf32>
      tpu.vector_store %arg4[%c0_115, %c0_116, %c0_117, %c0_118], %270 {strides = array<i32>} : memref<1x1x16x128xf32, #tpu.memory_space<vmem>>, vector<1x1x16x128xf32>,
    } else {
    }
    return
  }
  func.func @transform_0(%arg0: i32, %arg1: i32) -> i32 {
    %c0_i32 = arith.constant 0 : i32
    %c0_i32_0 = arith.constant 0 : i32
    return %c0_i32 : i32
  }
  func.func @transform_1(%arg0: i32, %arg1: i32) -> (i32, i32, i32, i32) {
    %c0_i32 = arith.constant 0 : i32
    %c0_i32_0 = arith.constant 0 : i32
    %c0_i32_1 = arith.constant 0 : i32
    return %arg0, %arg1, %c0_i32, %c0_i32_0 : i32, i32, i32, i32
  }
  func.func @transform_2(%arg0: i32, %arg1: i32) -> (i32, i32, i32, i32) {
    %c0_i32 = arith.constant 0 : i32
    %c0_i32_0 = arith.constant 0 : i32
    %c0_i32_1 = arith.constant 0 : i32
    %c0_i32_2 = arith.constant 0 : i32
    return %arg0, %c0_i32, %c0_i32_0, %c0_i32_1 : i32, i32, i32, i32
  }
}

</mosaic_0001>

<llo_original>
// kernel: tpu_custom_call.1
$region0: #{tpu_custom_call.1}
  #allocation0 [shape = 'u32[]', space=smem, size = 0x4, offset = 0x4, fixed_abs, tag = 'smem constant byte address 0x4 - core index']
  #allocation1 [shape = 'u32[144,128]{1,0:T(1,128)}', space=vmem, size = 0x12000, scoped, tag = 'internal scratch']
  #allocation2 [shape = 'f32[16,16]{1,0:T(8,128)}', space=vmem, size = 0x2000, scoped, tag = 'scratch operand']
  #allocation3 [shape = 'f32[24,256]{1,0:T(8,128)}', space=vmem, size = 0x6000, scoped, tag = 'scratch operand']
  %s0 = inlined_call_operand.hbm [shape: f32[49], index: 0, kind: input, shape index: {}]
  %s1 = inlined_call_operand.hbm [shape: f32[2,4,16,16], index: 1, kind: input, shape index: {}]
  %s2 = inlined_call_operand.hbm [shape: f32[2,1,16,128], index: 2, kind: output, shape index: {}]
  %s3 = sld [smem:[#allocation0]]
  $region61: #{tpu_custom_call.1} parent=0
    _
  %s5 = ssub.s32 1, %s3
  %s6 = scalar_select 0, %s5, %s3
  $region1: #{tpu_custom_call.1} parent=0
    #allocation4 [shape = 'u8[512]{0}', space=smem, size = 0x200, scoped, tag = 'input window, operand 0, single buffered']
    #allocation5 [shape = 's32[2]{0}', space=sflag, size = 0x8, scoped, tag = 'scoped memory for tpu_custom_call.1']
    #allocation6 [shape = 's32[2]{0}', space=sflag, size = 0x8, scoped, tag = 'scoped memory for tpu_custom_call.1']
    #allocation7 [shape = 's32[2]{0}', space=sflag, size = 0x8, scoped, tag = 'scoped memory for tpu_custom_call.1']
    #allocation8 [shape = 'u8[65536]{0}', space=vmem, size = 0x10000, scoped, tag = 'input window, operand 1']
    #allocation9 [shape = 'u8[16384]{0}', space=vmem, size = 0x4000, scoped, tag = 'output window, operand 0']
    %7 = vsyncpa [#allocation7], 0
    %8 = vsyncpa [#allocation5], 0
    %s9 = scalar_lea.sflag [#allocation5], 1
    %10 = vsyncpa %s9, 0
    %11 = vsyncpa [#allocation6], 0
    %s12 = scalar_lea.sflag [#allocation6], 1
    %13 = vsyncpa %s12, 0
    loop: start=0, step=1, limit=4
    $region2: #{tpu_custom_call.1} parent=1 // loop_pre_header
      _
    $region3: #{tpu_custom_call.1} parent=1 // loop_header
      %s15 = sphi 0, %s19
      %p16 = scmp.ge.s32.totalorder %s15, 4
      %s22 = sphi 0, %s34
      %s23 = sphi 0, %s30
      %s24 = sphi 0, %s22
      %s25 = sphi 0, %s23
      %s26 = sphi 0, %s24
      %s27 = sphi 0, %s25
      %s35 = sphi 0, %s35
      %s37 = sphi 0, %s35
      %s38 = sphi 0, %s37
      %s52 = sphi 0, %s38
      %s60 = sphi 0, %s62
      %s63 = sphi 0, %s60
      %s64 = sphi 0, %s63
      %s80 = sphi 0, %s64
      %s86 = sphi 0, %s88
      %s89 = sphi 0, %s86
      %s90 = sphi 0, %s89
      %s106 = sphi 0, %s90
    $region4: #{tpu_custom_call.1} parent=1 // loop_header_branch
      %18 = sbr.rel (%p16) target = $region8
    $region5: #{tpu_custom_call.1} parent=1 // loop_body
      %s20 = ssub.s32 %s15, 1
      %s21 = ssub.s32 %s15, 2
      %s28 = sadd.s32 1, %s23
      %p29 = scmp.ge.s32.totalorder %s28, 1
      %s30 = scalar_select %p29, 0, %s28
      %s31 = sadd.s32 1, %s22
      %s32 = scalar_select %p29, %s31, %s22
      %p33 = scmp.ge.s32.totalorder %s32, 2
      %s34 = scalar_select %p33, 0, %s32
      %s36 = sadd.s32 %s35, 1
      %p39 = scmp.eq.s32.totalorder %s15, 1
      %p40 = scmp.ne.s32.totalorder %s35, %s37
      %p41 = scmp.eq.s32.totalorder %s15, 0
      %p42 = por %p40, %p41
      %p43 = scmp.ne.s32.totalorder %s35, %s37
      %p44 = scmp.eq.s32.totalorder %s20, 1
      %p45 = por %p43, %p44
      %p46 = scmp.ne.s32.totalorder %s37, %s38
      %p47 = scmp.eq.s32.totalorder %s20, 0
      %p48 = por %p46, %p47
      %p49 = scmp.ne.s32.totalorder %s37, %s38
      %p50 = scmp.eq.s32.totalorder %s21, 1
      %p51 = por %p49, %p50
      %p53 = scmp.ne.s32.totalorder %s38, %s52
      %p54 = scmp.eq.s32.totalorder %s21, 0
      %p55 = por %p53, %p54
      %s56 = ssub.s32 %s22, %s34
      %s57 = ssub.s32 %s23, %s30
      %s58 = sor.u32 %s56, %s57
      %p59 = scmp.eq.s32.totalorder %s58, 0
      %s61 = sadd.s32 %s60, 1
      %s62 = scalar_select %p59, %s60, %s61
      %p65 = pneg %p59
      %p66 = scmp.eq.s32.totalorder %s15, 1
      %p67 = por %p65, %p66
      %p68 = scmp.ne.s32.totalorder %s60, %s63
      %p69 = scmp.eq.s32.totalorder %s15, 0
      %p70 = por %p68, %p69
      %p71 = scmp.ne.s32.totalorder %s60, %s63
      %p72 = scmp.eq.s32.totalorder %s20, 1
      %p73 = por %p71, %p72
      %p74 = scmp.ne.s32.totalorder %s63, %s64
      %p75 = scmp.eq.s32.totalorder %s20, 0
      %p76 = por %p74, %p75
      %p77 = scmp.ne.s32.totalorder %s63, %s64
      %p78 = scmp.eq.s32.totalorder %s21, 1
      %p79 = por %p77, %p78
      %p81 = scmp.ne.s32.totalorder %s64, %s80
      %p82 = scmp.eq.s32.totalorder %s21, 0
      %p83 = por %p81, %p82
      %s84 = ssub.s32 %s22, %s34
      %p85 = scmp.eq.s32.totalorder %s84, 0
      %s87 = sadd.s32 %s86, 1
      %s88 = scalar_select %p85, %s86, %s87
      %p91 = pneg %p85
      %p92 = scmp.eq.s32.totalorder %s15, 1
      %p93 = por %p91, %p92
      %p94 = scmp.ne.s32.totalorder %s86, %s89
      %p95 = scmp.eq.s32.totalorder %s15, 0
      %p96 = por %p94, %p95
      %p97 = scmp.ne.s32.totalorder %s86, %s89
      %p98 = scmp.eq.s32.totalorder %s20, 1
      %p99 = por %p97, %p98
      %p100 = scmp.ne.s32.totalorder %s89, %s90
      %p101 = scmp.eq.s32.totalorder %s20, 0
      %p102 = por %p100, %p101
      %p103 = scmp.ne.s32.totalorder %s89, %s90
      %p104 = scmp.eq.s32.totalorder %s21, 1
      %p105 = por %p103, %p104
      %p107 = scmp.ne.s32.totalorder %s90, %s106
      %p108 = scmp.eq.s32.totalorder %s21, 0
      %p109 = por %p107, %p108
      %p110 = scmp.le.s32.totalorder 1, %s15
      %p111 = scmp.lt.s32.totalorder %s15, 3
      %p112 = pnand %p110, %p111
      %p113 = pneg %p112
      // Predicated region
      $region9: #{tpu_custom_call.1} parent=5 // pred_check
        _
      $region10: #{tpu_custom_call.1} parent=5 // pred_check_branch
        %115 = sbr.rel (%p112) target = $region12
      $region11: #{tpu_custom_call.1} parent=5 // pred_region
        %s116 = ssub.s32 %s15, 1
        // Predicated region
        $region13: #{tpu_custom_call.1} parent=11 // pred_check
          %p117 = pneg %p48
        $region14: #{tpu_custom_call.1} parent=11 // pred_check_branch
          %119 = sbr.rel (%p117) target = $region16
        $region15: #{tpu_custom_call.1} parent=11 // pred_region
          %s121 = ssub.s32 16, 16
          %122 = vsyncadd [#allocation7], %s121
          %125 = dma.hbm_to_smem %s0, 16, [#allocation4], [#allocation7]
        $region16: #{tpu_custom_call.1} parent=11 // pred_fallthru
          _
      $region12: #{tpu_custom_call.1} parent=5 // pred_fallthru
        _
      %p126 = scmp.lt.s32.totalorder %s15, 2
      // Predicated region
      $region17: #{tpu_custom_call.1} parent=5 // pred_check
        %p127 = pneg %p126
      $region18: #{tpu_custom_call.1} parent=5 // pred_check_branch
        %129 = sbr.rel (%p127) target = $region20
      $region19: #{tpu_custom_call.1} parent=5 // pred_region
        // Predicated region
        $region21: #{tpu_custom_call.1} parent=19 // pred_check
          %p130 = pneg %p70
        $region22: #{tpu_custom_call.1} parent=19 // pred_check_branch
          %132 = sbr.rel (%p130) target = $region24
        $region23: #{tpu_custom_call.1} parent=19 // pred_region
          %s133 = sand.u32 %s60, 1
          %s134 = scalar_lea.sflag [#allocation5], %s133
          %s135 = sand.u32 %s60, 1
          %s136 = smul.addr %s135, 64
          %s137 = scalar_lea.vmem [#allocation8], %s136
          %s138 = smul.u32 4, %s23
          %s140 = ssub.s32 1024, 1024
          %141 = vsyncadd %s134, %s140
          %s142 = smul.addr %s138, 2
          %s143 = smul.addr %s22, 8
          %s144 = sadd.s32 %s142, %s143
          %s145 = smul.addr %s144, 128
          %s146 = scalar_lea.hbm %s1, %s145
          %s147 = sshll.u32 %s137, 4
          %s148 = int_to_ptr.vmem [resolvable:$true] %s147
          %153 = dma.hbm_to_vmem [thread:$0]  %s146, 1024, %s148, %s134, 128, 128, 8
        $region24: #{tpu_custom_call.1} parent=19 // pred_fallthru
          _
      $region20: #{tpu_custom_call.1} parent=5 // pred_fallthru
        _
      %p154 = scmp.le.s32.totalorder 1, %s15
      %p155 = scmp.lt.s32.totalorder %s15, 3
      %p156 = pnand %p154, %p155
      %p157 = pneg %p156
      // Predicated region
      $region25: #{tpu_custom_call.1} parent=5 // pred_check
        _
      $region26: #{tpu_custom_call.1} parent=5 // pred_check_branch
        %159 = sbr.rel (%p156) target = $region28
      $region27: #{tpu_custom_call.1} parent=5 // pred_region
        %s160 = ssub.s32 %s15, 1
        // Predicated region
        $region29: #{tpu_custom_call.1} parent=27 // pred_check
          %p161 = pneg %p48
        $region30: #{tpu_custom_call.1} parent=27 // pred_check_branch
          %163 = sbr.rel (%p161) target = $region32
        $region31: #{tpu_custom_call.1} parent=27 // pred_region
          %164 = dma.done [#allocation7], 16
        $region32: #{tpu_custom_call.1} parent=27 // pred_fallthru
          _
        %s165 = sand.u32 %s63, 1
        %s166 = scalar_lea.sflag [#allocation5], %s165
        %s167 = sand.u32 %s63, 1
        %s168 = smul.addr %s167, 64
        %s169 = scalar_lea.vmem [#allocation8], %s168
        // Predicated region
        $region33: #{tpu_custom_call.1} parent=27 // pred_check
          %p170 = pneg %p76
        $region34: #{tpu_custom_call.1} parent=27 // pred_check_branch
          %172 = sbr.rel (%p170) target = $region36
        $region35: #{tpu_custom_call.1} parent=27 // pred_region
          %173 = dma.done %s166, 1024
        $region36: #{tpu_custom_call.1} parent=27 // pred_fallthru
          _
        %174 = sfence
        %p175 = pneg %p48
        %p176 = pneg %p45
        %s177 = sand.u32 %s63, 1
        %s178 = scalar_lea.sflag [#allocation5], %s177
        %s179 = sand.u32 %s63, 1
        %s180 = smul.addr %s179, 64
        %s181 = scalar_lea.vmem [#allocation8], %s180
        %p182 = pneg %p76
        %p183 = pneg %p73
        %p184 = pneg %p102
        %p185 = pneg %p99
        %s186 = sand.u32 %s89, 1
        %s187 = scalar_lea.sflag [#allocation6], %s186
        %s188 = sand.u32 %s89, 1
        %s189 = smul.addr %s188, 16
        %s190 = scalar_lea.vmem [#allocation9], %s189
        %s191 = smul.u32 4, %s25
        %v192 = vld [vmem:[%s169] sm:$0xff]
        %v193 = vld [vmem:[%s169 + $0x8] sm:$0xff]
        %v194 = vld [vmem:[%s169 + $0x10] sm:$0xff]
        %v195 = vld [vmem:[%s169 + $0x18] sm:$0xff]
        %v196 = vld [vmem:[%s169 + $0x20] sm:$0xff]
        %v197 = vld [vmem:[%s169 + $0x28] sm:$0xff]
        %v198 = vld [vmem:[%s169 + $0x30] sm:$0xff]
        %v199 = vld [vmem:[%s169 + $0x38] sm:$0xff]
        %vm200 = vcmask 130048
        %v201 = vsel %vm200, %v192, -inf
        %v202 = vsel %vm200, %v194, -inf
        %v203 = vsel %vm200, %v196, -inf
        %v204 = vmax.f32 %v201, %v203
        %v205 = vsel %vm200, %v198, -inf
        %v206 = vmax.f32 %v202, %v205
        %v207 = vmax.f32 %v204, %v206
        %v208 = vsel %vm200, %v193, -inf
        %v209 = vsel %vm200, %v195, -inf
        %v210 = vsel %vm200, %v197, -inf
        %v211 = vmax.f32 %v208, %v210
        %v212 = vsel %vm200, %v199, -inf
        %v213 = vmax.f32 %v209, %v212
        %v214 = vmax.f32 %v211, %v213
        %p215 = scmp.eq.s32.totalorder %s25, 0
        // Predicated region
        $region37: #{tpu_custom_call.1} parent=27 // pred_check
          %p216 = pneg %p215
        $region38: #{tpu_custom_call.1} parent=27 // pred_check_branch
          %218 = sbr.rel (%p216) target = $region40
        $region39: #{tpu_custom_call.1} parent=27 // pred_region
          %219 = vst.msk [vmem:[#allocation2] sm:$0xff] %vm200, %v207
          %220 = vst.msk [vmem:[#allocation2 + $0x8] sm:$0xff] %vm200, %v214
        $region40: #{tpu_custom_call.1} parent=27 // pred_fallthru
          _
        %p221 = scmp.ne.s32.totalorder %s25, 0
        // Predicated region
        $region41: #{tpu_custom_call.1} parent=27 // pred_check
          %p222 = pneg %p221
        $region42: #{tpu_custom_call.1} parent=27 // pred_check_branch
          %224 = sbr.rel (%p222) target = $region44
        $region43: #{tpu_custom_call.1} parent=27 // pred_region
          %v225 = vld [vmem:[#allocation2] sm:$0xff]
          %v226 = vld [vmem:[#allocation2 + $0x8] sm:$0xff]
          %v227 = vmax.f32 %v225, %v207
          %v228 = vmax.f32 %v226, %v214
          %229 = vst.msk [vmem:[#allocation2] sm:$0xff] %vm200, %v227
          %230 = vst.msk [vmem:[#allocation2 + $0x8] sm:$0xff] %vm200, %v228
        $region44: #{tpu_custom_call.1} parent=27 // pred_fallthru
          _
        // Predicated region
        $region45: #{tpu_custom_call.1} parent=27 // pred_check
          %p231 = pneg %p215
        $region46: #{tpu_custom_call.1} parent=27 // pred_check_branch
          %233 = sbr.rel (%p231) target = $region48
        $region47: #{tpu_custom_call.1} parent=27 // pred_region
          %234 = vst [vmem:[#allocation3] sm:$0xff] 0.0
          %235 = vst [vmem:[#allocation3 + $0x8] sm:$0xff] 0.0
          %236 = vst [vmem:[#allocation3 + $0x10] sm:$0xff] 0.0
          %237 = vst [vmem:[#allocation3 + $0x18] sm:$0xff] 0.0
          %238 = vst [vmem:[#allocation3 + $0x20] sm:$0xff] 0.0
          %239 = vst [vmem:[#allocation3 + $0x28] sm:$0xff] 0.0
          %v240 = vld [vmem:[#allocation2] sm:$0xff]
          %v241 = vld [vmem:[#allocation2 + $0x8] sm:$0xff]
          %vm244 = vcmask 1042432
          %v245 = vrot.slane %v240, 5
          %v246 = vrot.slane %v241, 5
          %v247 = vsel %vm244, %v245, %v246
          %248 = vrot.lane.b32.xlu0 %v245, 3
          %v249 = vpop.permute.xlu0 %248
          %250 = vrot.lane.b32.xlu0 %v247, 3
          %v251 = vpop.permute.xlu0 %250
          %252 = vrot.lane.b32.xlu0 %v246, 3
          %v253 = vpop.permute.xlu0 %252
          %vm257 = vcmask 154651
          %258 = vst.msk [vmem:[#allocation3] sm:$0xf8] %vm257, %v249
          %vm259 = vcmask 154648
          %260 = vst.msk [vmem:[#allocation3 + $0x10] sm:$0xff] %vm259, %v251
          %vm261 = vcmask 149528
          %262 = vst.msk [vmem:[#allocation3 + $0x20] sm:$0x7] %vm261, %v253
          %s263 = sld [smem:[#allocation4]]
          %s264 = sld [smem:[#allocation4 + $0x1]]
          %s265 = sld [smem:[#allocation4 + $0x2]]
          %s266 = sld [smem:[#allocation4 + $0x3]]
          %s267 = sld [smem:[#allocation4 + $0x4]]
          %s268 = sld [smem:[#allocation4 + $0x5]]
          %s269 = sld [smem:[#allocation4 + $0x6]]
          %s270 = sld [smem:[#allocation4 + $0x7]]
          %s271 = sld [smem:[#allocation4 + $0x8]]
          %s272 = sld [smem:[#allocation4 + $0x9]]
          %s273 = sld [smem:[#allocation4 + $0xa]]
          %s274 = sld [smem:[#allocation4 + $0xb]]
          %s275 = sld [smem:[#allocation4 + $0xc]]
          %s276 = sld [smem:[#allocation4 + $0xd]]
          %s277 = sld [smem:[#allocation4 + $0xe]]
          %s278 = sld [smem:[#allocation4 + $0xf]]
          %s279 = sld [smem:[#allocation4 + $0x10]]
          %s280 = sld [smem:[#allocation4 + $0x11]]
          %s281 = sld [smem:[#allocation4 + $0x12]]
          %s282 = sld [smem:[#allocation4 + $0x13]]
          %s283 = sld [smem:[#allocation4 + $0x14]]
          %s284 = sld [smem:[#allocation4 + $0x15]]
          %s285 = sld [smem:[#allocation4 + $0x16]]
          %s286 = sld [smem:[#allocation4 + $0x17]]
          %s287 = sld [smem:[#allocation4 + $0x18]]
          %s288 = sld [smem:[#allocation4 + $0x19]]
          %s289 = sld [smem:[#allocation4 + $0x1a]]
          %s290 = sld [smem:[#allocation4 + $0x1b]]
          %s291 = sld [smem:[#allocation4 + $0x1c]]
          %s292 = sld [smem:[#allocation4 + $0x1d]]
          %s293 = sld [smem:[#allocation4 + $0x1e]]
          %s294 = sld [smem:[#allocation4 + $0x1f]]
          %s295 = sld [smem:[#allocation4 + $0x20]]
          %s296 = sld [smem:[#allocation4 + $0x21]]
          %s297 = sld [smem:[#allocation4 + $0x22]]
          %s298 = sld [smem:[#allocation4 + $0x23]]
          %s299 = sld [smem:[#allocation4 + $0x24]]
          %s300 = sld [smem:[#allocation4 + $0x25]]
          %s301 = sld [smem:[#allocation4 + $0x26]]
          %s302 = sld [smem:[#allocation4 + $0x27]]
          %s303 = sld [smem:[#allocation4 + $0x28]]
          %s304 = sld [smem:[#allocation4 + $0x29]]
          %s305 = sld [smem:[#allocation4 + $0x2a]]
          %s306 = sld [smem:[#allocation4 + $0x2b]]
          %s307 = sld [smem:[#allocation4 + $0x2c]]
          %s308 = sld [smem:[#allocation4 + $0x2d]]
          %s309 = sld [smem:[#allocation4 + $0x2e]]
          %s310 = sld [smem:[#allocation4 + $0x2f]]
          %s311 = sld [smem:[#allocation4 + $0x30]]
          %v312 = vld [vmem:[#allocation3] sm:$0xff]
          %v313 = vld [vmem:[#allocation3 + $0x10] sm:$0xff]
          %v314 = vstv %s263
          %v315 = vmul.f32 %v314, %v312
          %v316 = vmul.f32 %v314, %v313
          %v317 = vadd.f32 %v315, 0.0
          %v318 = vadd.f32 %v316, 0.0
          %v319 = vld [vmem:[#allocation3 + $0x8] sm:$0xff]
          %v320 = vld [vmem:[#allocation3 + $0x18] sm:$0xff]
          %v321 = vstv %s264
          %v322 = vmul.f32 %v321, %v312
          %v323 = vmul.f32 %v321, %v319
          %v324 = vmul.f32 %v321, %v313
          %v325 = vmul.f32 %v321, %v320
          %330 = vrot.lane.b32.xlu0 %v322, 127
          %v331 = vpop.permute.xlu0 %330
          %332 = vrot.lane.b32.xlu0 %v323, 127
          %v333 = vpop.permute.xlu0 %332
          %334 = vrot.lane.b32.xlu0 %v324, 127
          %v335 = vpop.permute.xlu0 %334
          %336 = vrot.lane.b32.xlu0 %v325, 127
          %v337 = vpop.permute.xlu0 %336
          %vm338 = vcmask 1039360
          %v339 = vsel %vm338, %v331, %v333
          %v340 = vsel %vm338, %v335, %v337
          %v343 = vadd.f32 %v317, %v339
          %v344 = vadd.f32 %v318, %v340
          %v345 = vstv %s265
          %v346 = vmul.f32 %v345, %v312
          %v347 = vmul.f32 %v345, %v319
          %v348 = vmul.f32 %v345, %v313
          %v349 = vmul.f32 %v345, %v320
          %354 = vrot.lane.b32.xlu0 %v346, 126
          %v355 = vpop.permute.xlu0 %354
          %356 = vrot.lane.b32.xlu0 %v347, 126
          %v357 = vpop.permute.xlu0 %356
          %358 = vrot.lane.b32.xlu0 %v348, 126
          %v359 = vpop.permute.xlu0 %358
          %360 = vrot.lane.b32.xlu0 %v349, 126
          %v361 = vpop.permute.xlu0 %360
          %vm362 = vcmask 1031168
          %v363 = vsel %vm362, %v355, %v357
          %v364 = vsel %vm362, %v359, %v361
          %v367 = vadd.f32 %v343, %v363
          %v368 = vadd.f32 %v344, %v364
          %v369 = vstv %s266
          %v370 = vmul.f32 %v369, %v312
          %v371 = vmul.f32 %v369, %v319
          %v372 = vmul.f32 %v369, %v313
          %v373 = vmul.f32 %v369, %v320
          %378 = vrot.lane.b32.xlu0 %v370, 125
          %v379 = vpop.permute.xlu0 %378
          %380 = vrot.lane.b32.xlu0 %v371, 125
          %v381 = vpop.permute.xlu0 %380
          %382 = vrot.lane.b32.xlu0 %v372, 125
          %v383 = vpop.permute.xlu0 %382
          %384 = vrot.lane.b32.xlu0 %v373, 125
          %v385 = vpop.permute.xlu0 %384
          %vm386 = vcmask 1022976
          %v387 = vsel %vm386, %v379, %v381
          %v388 = vsel %vm386, %v383, %v385
          %v391 = vadd.f32 %v367, %v387
          %v392 = vadd.f32 %v368, %v388
          %v393 = vstv %s267
          %v394 = vmul.f32 %v393, %v312
          %v395 = vmul.f32 %v393, %v319
          %v396 = vmul.f32 %v393, %v313
          %v397 = vmul.f32 %v393, %v320
          %402 = vrot.lane.b32.xlu0 %v394, 124
          %v403 = vpop.permute.xlu0 %402
          %404 = vrot.lane.b32.xlu0 %v395, 124
          %v405 = vpop.permute.xlu0 %404
          %406 = vrot.lane.b32.xlu0 %v396, 124
          %v407 = vpop.permute.xlu0 %406
          %408 = vrot.lane.b32.xlu0 %v397, 124
          %v409 = vpop.permute.xlu0 %408
          %vm410 = vcmask 1014784
          %v411 = vsel %vm410, %v403, %v405
          %v412 = vsel %vm410, %v407, %v409
          %v415 = vadd.f32 %v391, %v411
          %v416 = vadd.f32 %v392, %v412
          %v417 = vstv %s268
          %v418 = vmul.f32 %v417, %v312
          %v419 = vmul.f32 %v417, %v319
          %v420 = vmul.f32 %v417, %v313
          %v421 = vmul.f32 %v417, %v320
          %426 = vrot.lane.b32.xlu0 %v418, 123
          %v427 = vpop.permute.xlu0 %426
          %428 = vrot.lane.b32.xlu0 %v419, 123
          %v429 = vpop.permute.xlu0 %428
          %430 = vrot.lane.b32.xlu0 %v420, 123
          %v431 = vpop.permute.xlu0 %430
          %432 = vrot.lane.b32.xlu0 %v421, 123
          %v433 = vpop.permute.xlu0 %432
          %vm434 = vcmask 1006592
          %v435 = vsel %vm434, %v427, %v429
          %v436 = vsel %vm434, %v431, %v433
          %v439 = vadd.f32 %v415, %v435
          %v440 = vadd.f32 %v416, %v436
          %v441 = vstv %s269
          %v442 = vmul.f32 %v441, %v312
          %v443 = vmul.f32 %v441, %v319
          %v444 = vmul.f32 %v441, %v313
          %v445 = vmul.f32 %v441, %v320
          %450 = vrot.lane.b32.xlu0 %v442, 122
          %v451 = vpop.permute.xlu0 %450
          %452 = vrot.lane.b32.xlu0 %v443, 122
          %v453 = vpop.permute.xlu0 %452
          %454 = vrot.lane.b32.xlu0 %v444, 122
          %v455 = vpop.permute.xlu0 %454
          %456 = vrot.lane.b32.xlu0 %v445, 122
          %v457 = vpop.permute.xlu0 %456
          %vm458 = vcmask 998400
          %v459 = vsel %vm458, %v451, %v453
          %v460 = vsel %vm458, %v455, %v457
          %v463 = vadd.f32 %v439, %v459
          %v464 = vadd.f32 %v440, %v460
          %v465 = vld [vmem:[#allocation3] sm:$0xfe]
          %v466 = vld [vmem:[#allocation3 + $0x20] sm:$0x1]
          %v467 = vstv %s270
          %v468 = vmul.f32 %v467, %v465
          %v469 = vmul.f32 %v467, %v313
          %v470 = vmul.f32 %v467, %v466
          %vm474 = vcmask 1046528
          %v475 = vrot.slane %v468, 1
          %v476 = vrot.slane %v469, 1
          %v477 = vsel %vm474, %v475, %v476
          %v478 = vrot.slane %v470, 1
          %v479 = vsel %vm474, %v476, %v478
          %v482 = vadd.f32 %v463, %v477
          %v483 = vadd.f32 %v464, %v479
          %v484 = vld [vmem:[#allocation3] sm:$0xfe]
          %v485 = vld [vmem:[#allocation3 + $0x8] sm:$0xfe]
          %v486 = vld [vmem:[#allocation3 + $0x10] sm:$0xff]
          %v487 = vld [vmem:[#allocation3 + $0x18] sm:$0xff]
          %v488 = vld [vmem:[#allocation3 + $0x20] sm:$0x1]
          %v489 = vld [vmem:[#allocation3 + $0x28] sm:$0x1]
          %v490 = vstv %s271
          %v491 = vmul.f32 %v490, %v484
          %v492 = vmul.f32 %v490, %v485
          %v493 = vmul.f32 %v490, %v486
          %v494 = vmul.f32 %v490, %v487
          %v495 = vmul.f32 %v490, %v488
          %v496 = vmul.f32 %v490, %v489
          %v503 = vrot.slane %v491, 1
          %v504 = vrot.slane %v493, 1
          %v505 = vsel %vm474, %v503, %v504
          %v506 = vrot.slane %v492, 1
          %v507 = vrot.slane %v494, 1
          %v508 = vsel %vm474, %v506, %v507
          %v509 = vrot.slane %v495, 1
          %v510 = vsel %vm474, %v504, %v509
          %v511 = vrot.slane %v496, 1
          %v512 = vsel %vm474, %v507, %v511
          %513 = vrot.lane.b32.xlu0 %v505, 127
          %v514 = vpop.permute.xlu0 %513
          %515 = vrot.lane.b32.xlu0 %v508, 127
          %v516 = vpop.permute.xlu0 %515
          %517 = vrot.lane.b32.xlu0 %v510, 127
          %v518 = vpop.permute.xlu0 %517
          %519 = vrot.lane.b32.xlu0 %v512, 127
          %v520 = vpop.permute.xlu0 %519
          %v521 = vsel %vm338, %v514, %v516
          %v522 = vsel %vm338, %v518, %v520
          %v525 = vadd.f32 %v482, %v521
          %v526 = vadd.f32 %v483, %v522
          %v527 = vstv %s272
          %v528 = vmul.f32 %v527, %v484
          %v529 = vmul.f32 %v527, %v485
          %v530 = vmul.f32 %v527, %v486
          %v531 = vmul.f32 %v527, %v487
          %v532 = vmul.f32 %v527, %v488
          %v533 = vmul.f32 %v527, %v489
          %v540 = vrot.slane %v528, 1
          %v541 = vrot.slane %v530, 1
          %v542 = vsel %vm474, %v540, %v541
          %v543 = vrot.slane %v529, 1
          %v544 = vrot.slane %v531, 1
          %v545 = vsel %vm474, %v543, %v544
          %v546 = vrot.slane %v532, 1
          %v547 = vsel %vm474, %v541, %v546
          %v548 = vrot.slane %v533, 1
          %v549 = vsel %vm474, %v544, %v548
          %550 = vrot.lane.b32.xlu0 %v542, 126
          %v551 = vpop.permute.xlu0 %550
          %552 = vrot.lane.b32.xlu0 %v545, 126
          %v553 = vpop.permute.xlu0 %552
          %554 = vrot.lane.b32.xlu0 %v547, 126
          %v555 = vpop.permute.xlu0 %554
          %556 = vrot.lane.b32.xlu0 %v549, 126
          %v557 = vpop.permute.xlu0 %556
          %v558 = vsel %vm362, %v551, %v553
          %v559 = vsel %vm362, %v555, %v557
          %v562 = vadd.f32 %v525, %v558
          %v563 = vadd.f32 %v526, %v559
          %v564 = vstv %s273
          %v565 = vmul.f32 %v564, %v484
          %v566 = vmul.f32 %v564, %v485
          %v567 = vmul.f32 %v564, %v486
          %v568 = vmul.f32 %v564, %v487
          %v569 = vmul.f32 %v564, %v488
          %v570 = vmul.f32 %v564, %v489
          %v577 = vrot.slane %v565, 1
          %v578 = vrot.slane %v567, 1
          %v579 = vsel %vm474, %v577, %v578
          %v580 = vrot.slane %v566, 1
          %v581 = vrot.slane %v568, 1
          %v582 = vsel %vm474, %v580, %v581
          %v583 = vrot.slane %v569, 1
          %v584 = vsel %vm474, %v578, %v583
          %v585 = vrot.slane %v570, 1
          %v586 = vsel %vm474, %v581, %v585
          %587 = vrot.lane.b32.xlu0 %v579, 125
          %v588 = vpop.permute.xlu0 %587
          %589 = vrot.lane.b32.xlu0 %v582, 125
          %v590 = vpop.permute.xlu0 %589
          %591 = vrot.lane.b32.xlu0 %v584, 125
          %v592 = vpop.permute.xlu0 %591
          %593 = vrot.lane.b32.xlu0 %v586, 125
          %v594 = vpop.permute.xlu0 %593
          %v595 = vsel %vm386, %v588, %v590
          %v596 = vsel %vm386, %v592, %v594
          %v599 = vadd.f32 %v562, %v595
          %v600 = vadd.f32 %v563, %v596
          %v601 = vstv %s274
          %v602 = vmul.f32 %v601, %v484
          %v603 = vmul.f32 %v601, %v485
          %v604 = vmul.f32 %v601, %v486
          %v605 = vmul.f32 %v601, %v487
          %v606 = vmul.f32 %v601, %v488
          %v607 = vmul.f32 %v601, %v489
          %v614 = vrot.slane %v602, 1
          %v615 = vrot.slane %v604, 1
          %v616 = vsel %vm474, %v614, %v615
          %v617 = vrot.slane %v603, 1
          %v618 = vrot.slane %v605, 1
          %v619 = vsel %vm474, %v617, %v618
          %v620 = vrot.slane %v606, 1
          %v621 = vsel %vm474, %v615, %v620
          %v622 = vrot.slane %v607, 1
          %v623 = vsel %vm474, %v618, %v622
          %624 = vrot.lane.b32.xlu0 %v616, 124
          %v625 = vpop.permute.xlu0 %624
          %626 = vrot.lane.b32.xlu0 %v619, 124
          %v627 = vpop.permute.xlu0 %626
          %628 = vrot.lane.b32.xlu0 %v621, 124
          %v629 = vpop.permute.xlu0 %628
          %630 = vrot.lane.b32.xlu0 %v623, 124
          %v631 = vpop.permute.xlu0 %630
          %v632 = vsel %vm410, %v625, %v627
          %v633 = vsel %vm410, %v629, %v631
          %v636 = vadd.f32 %v599, %v632
          %v637 = vadd.f32 %v600, %v633
          %v638 = vstv %s275
          %v639 = vmul.f32 %v638, %v484
          %v640 = vmul.f32 %v638, %v485
          %v641 = vmul.f32 %v638, %v486
          %v642 = vmul.f32 %v638, %v487
          %v643 = vmul.f32 %v638, %v488
          %v644 = vmul.f32 %v638, %v489
          %v651 = vrot.slane %v639, 1
          %v652 = vrot.slane %v641, 1
          %v653 = vsel %vm474, %v651, %v652
          %v654 = vrot.slane %v640, 1
          %v655 = vrot.slane %v642, 1
          %v656 = vsel %vm474, %v654, %v655
          %v657 = vrot.slane %v643, 1
          %v658 = vsel %vm474, %v652, %v657
          %v659 = vrot.slane %v644, 1
          %v660 = vsel %vm474, %v655, %v659
          %661 = vrot.lane.b32.xlu0 %v653, 123
          %v662 = vpop.permute.xlu0 %661
          %663 = vrot.lane.b32.xlu0 %v656, 123
          %v664 = vpop.permute.xlu0 %663
          %665 = vrot.lane.b32.xlu0 %v658, 123
          %v666 = vpop.permute.xlu0 %665
          %667 = vrot.lane.b32.xlu0 %v660, 123
          %v668 = vpop.permute.xlu0 %667
          %v669 = vsel %vm434, %v662, %v664
          %v670 = vsel %vm434, %v666, %v668
          %v673 = vadd.f32 %v636, %v669
          %v674 = vadd.f32 %v637, %v670
          %v675 = vstv %s276
          %v676 = vmul.f32 %v675, %v484
          %v677 = vmul.f32 %v675, %v485
          %v678 = vmul.f32 %v675, %v486
          %v679 = vmul.f32 %v675, %v487
          %v680 = vmul.f32 %v675, %v488
          %v681 = vmul.f32 %v675, %v489
          %v688 = vrot.slane %v676, 1
          %v689 = vrot.slane %v678, 1
          %v690 = vsel %vm474, %v688, %v689
          %v691 = vrot.slane %v677, 1
          %v692 = vrot.slane %v679, 1
          %v693 = vsel %vm474, %v691, %v692
          %v694 = vrot.slane %v680, 1
          %v695 = vsel %vm474, %v689, %v694
          %v696 = vrot.slane %v681, 1
          %v697 = vsel %vm474, %v692, %v696
          %698 = vrot.lane.b32.xlu0 %v690, 122
          %v699 = vpop.permute.xlu0 %698
          %700 = vrot.lane.b32.xlu0 %v693, 122
          %v701 = vpop.permute.xlu0 %700
          %702 = vrot.lane.b32.xlu0 %v695, 122
          %v703 = vpop.permute.xlu0 %702
          %704 = vrot.lane.b32.xlu0 %v697, 122
          %v705 = vpop.permute.xlu0 %704
          %v706 = vsel %vm458, %v699, %v701
          %v707 = vsel %vm458, %v703, %v705
          %v710 = vadd.f32 %v673, %v706
          %v711 = vadd.f32 %v674, %v707
          %v712 = vld [vmem:[#allocation3] sm:$0xfc]
          %v713 = vld [vmem:[#allocation3 + $0x20] sm:$0x3]
          %v714 = vstv %s277
          %v715 = vmul.f32 %v714, %v712
          %v716 = vmul.f32 %v714, %v313
          %v717 = vmul.f32 %v714, %v713
          %vm721 = vcmask 1045504
          %v722 = vrot.slane %v715, 2
          %v723 = vrot.slane %v716, 2
          %v724 = vsel %vm721, %v722, %v723
          %v725 = vrot.slane %v717, 2
          %v726 = vsel %vm721, %v723, %v725
          %v729 = vadd.f32 %v710, %v724
          %v730 = vadd.f32 %v711, %v726
          %v731 = vld [vmem:[#allocation3] sm:$0xfc]
          %v732 = vld [vmem:[#allocation3 + $0x8] sm:$0xfc]
          %v733 = vld [vmem:[#allocation3 + $0x20] sm:$0x3]
          %v734 = vld [vmem:[#allocation3 + $0x28] sm:$0x3]
          %v735 = vstv %s278
          %v736 = vmul.f32 %v735, %v731
          %v737 = vmul.f32 %v735, %v732
          %v738 = vmul.f32 %v735, %v486
          %v739 = vmul.f32 %v735, %v487
          %v740 = vmul.f32 %v735, %v733
          %v741 = vmul.f32 %v735, %v734
          %v748 = vrot.slane %v736, 2
          %v749 = vrot.slane %v738, 2
          %v750 = vsel %vm721, %v748, %v749
          %v751 = vrot.slane %v737, 2
          %v752 = vrot.slane %v739, 2
          %v753 = vsel %vm721, %v751, %v752
          %v754 = vrot.slane %v740, 2
          %v755 = vsel %vm721, %v749, %v754
          %v756 = vrot.slane %v741, 2
          %v757 = vsel %vm721, %v752, %v756
          %758 = vrot.lane.b32.xlu0 %v750, 127
          %v759 = vpop.permute.xlu0 %758
          %760 = vrot.lane.b32.xlu0 %v753, 127
          %v761 = vpop.permute.xlu0 %760
          %762 = vrot.lane.b32.xlu0 %v755, 127
          %v763 = vpop.permute.xlu0 %762
          %764 = vrot.lane.b32.xlu0 %v757, 127
          %v765 = vpop.permute.xlu0 %764
          %v766 = vsel %vm338, %v759, %v761
          %v767 = vsel %vm338, %v763, %v765
          %v770 = vadd.f32 %v729, %v766
          %v771 = vadd.f32 %v730, %v767
          %v772 = vstv %s279
          %v773 = vmul.f32 %v772, %v731
          %v774 = vmul.f32 %v772, %v732
          %v775 = vmul.f32 %v772, %v486
          %v776 = vmul.f32 %v772, %v487
          %v777 = vmul.f32 %v772, %v733
          %v778 = vmul.f32 %v772, %v734
          %v785 = vrot.slane %v773, 2
          %v786 = vrot.slane %v775, 2
          %v787 = vsel %vm721, %v785, %v786
          %v788 = vrot.slane %v774, 2
          %v789 = vrot.slane %v776, 2
          %v790 = vsel %vm721, %v788, %v789
          %v791 = vrot.slane %v777, 2
          %v792 = vsel %vm721, %v786, %v791
          %v793 = vrot.slane %v778, 2
          %v794 = vsel %vm721, %v789, %v793
          %795 = vrot.lane.b32.xlu0 %v787, 126
          %v796 = vpop.permute.xlu0 %795
          %797 = vrot.lane.b32.xlu0 %v790, 126
          %v798 = vpop.permute.xlu0 %797
          %799 = vrot.lane.b32.xlu0 %v792, 126
          %v800 = vpop.permute.xlu0 %799
          %801 = vrot.lane.b32.xlu0 %v794, 126
          %v802 = vpop.permute.xlu0 %801
          %v803 = vsel %vm362, %v796, %v798
          %v804 = vsel %vm362, %v800, %v802
          %v807 = vadd.f32 %v770, %v803
          %v808 = vadd.f32 %v771, %v804
          %v809 = vstv %s280
          %v810 = vmul.f32 %v809, %v731
          %v811 = vmul.f32 %v809, %v732
          %v812 = vmul.f32 %v809, %v486
          %v813 = vmul.f32 %v809, %v487
          %v814 = vmul.f32 %v809, %v733
          %v815 = vmul.f32 %v809, %v734
          %v822 = vrot.slane %v810, 2
          %v823 = vrot.slane %v812, 2
          %v824 = vsel %vm721, %v822, %v823
          %v825 = vrot.slane %v811, 2
          %v826 = vrot.slane %v813, 2
          %v827 = vsel %vm721, %v825, %v826
          %v828 = vrot.slane %v814, 2
          %v829 = vsel %vm721, %v823, %v828
          %v830 = vrot.slane %v815, 2
          %v831 = vsel %vm721, %v826, %v830
          %832 = vrot.lane.b32.xlu0 %v824, 125
          %v833 = vpop.permute.xlu0 %832
          %834 = vrot.lane.b32.xlu0 %v827, 125
          %v835 = vpop.permute.xlu0 %834
          %836 = vrot.lane.b32.xlu0 %v829, 125
          %v837 = vpop.permute.xlu0 %836
          %838 = vrot.lane.b32.xlu0 %v831, 125
          %v839 = vpop.permute.xlu0 %838
          %v840 = vsel %vm386, %v833, %v835
          %v841 = vsel %vm386, %v837, %v839
          %v844 = vadd.f32 %v807, %v840
          %v845 = vadd.f32 %v808, %v841
          %v846 = vstv %s281
          %v847 = vmul.f32 %v846, %v731
          %v848 = vmul.f32 %v846, %v732
          %v849 = vmul.f32 %v846, %v486
          %v850 = vmul.f32 %v846, %v487
          %v851 = vmul.f32 %v846, %v733
          %v852 = vmul.f32 %v846, %v734
          %v859 = vrot.slane %v847, 2
          %v860 = vrot.slane %v849, 2
          %v861 = vsel %vm721, %v859, %v860
          %v862 = vrot.slane %v848, 2
          %v863 = vrot.slane %v850, 2
          %v864 = vsel %vm721, %v862, %v863
          %v865 = vrot.slane %v851, 2
          %v866 = vsel %vm721, %v860, %v865
          %v867 = vrot.slane %v852, 2
          %v868 = vsel %vm721, %v863, %v867
          %869 = vrot.lane.b32.xlu0 %v861, 124
          %v870 = vpop.permute.xlu0 %869
          %871 = vrot.lane.b32.xlu0 %v864, 124
          %v872 = vpop.permute.xlu0 %871
          %873 = vrot.lane.b32.xlu0 %v866, 124
          %v874 = vpop.permute.xlu0 %873
          %875 = vrot.lane.b32.xlu0 %v868, 124
          %v876 = vpop.permute.xlu0 %875
          %v877 = vsel %vm410, %v870, %v872
          %v878 = vsel %vm410, %v874, %v876
          %v881 = vadd.f32 %v844, %v877
          %v882 = vadd.f32 %v845, %v878
          %v883 = vstv %s282
          %v884 = vmul.f32 %v883, %v731
          %v885 = vmul.f32 %v883, %v732
          %v886 = vmul.f32 %v883, %v486
          %v887 = vmul.f32 %v883, %v487
          %v888 = vmul.f32 %v883, %v733
          %v889 = vmul.f32 %v883, %v734
          %v896 = vrot.slane %v884, 2
          %v897 = vrot.slane %v886, 2
          %v898 = vsel %vm721, %v896, %v897
          %v899 = vrot.slane %v885, 2
          %v900 = vrot.slane %v887, 2
          %v901 = vsel %vm721, %v899, %v900
          %v902 = vrot.slane %v888, 2
          %v903 = vsel %vm721, %v897, %v902
          %v904 = vrot.slane %v889, 2
          %v905 = vsel %vm721, %v900, %v904
          %906 = vrot.lane.b32.xlu0 %v898, 123
          %v907 = vpop.permute.xlu0 %906
          %908 = vrot.lane.b32.xlu0 %v901, 123
          %v909 = vpop.permute.xlu0 %908
          %910 = vrot.lane.b32.xlu0 %v903, 123
          %v911 = vpop.permute.xlu0 %910
          %912 = vrot.lane.b32.xlu0 %v905, 123
          %v913 = vpop.permute.xlu0 %912
          %v914 = vsel %vm434, %v907, %v909
          %v915 = vsel %vm434, %v911, %v913
          %v918 = vadd.f32 %v881, %v914
          %v919 = vadd.f32 %v882, %v915
          %v920 = vstv %s283
          %v921 = vmul.f32 %v920, %v731
          %v922 = vmul.f32 %v920, %v732
          %v923 = vmul.f32 %v920, %v486
          %v924 = vmul.f32 %v920, %v487
          %v925 = vmul.f32 %v920, %v733
          %v926 = vmul.f32 %v920, %v734
          %v933 = vrot.slane %v921, 2
          %v934 = vrot.slane %v923, 2
          %v935 = vsel %vm721, %v933, %v934
          %v936 = vrot.slane %v922, 2
          %v937 = vrot.slane %v924, 2
          %v938 = vsel %vm721, %v936, %v937
          %v939 = vrot.slane %v925, 2
          %v940 = vsel %vm721, %v934, %v939
          %v941 = vrot.slane %v926, 2
          %v942 = vsel %vm721, %v937, %v941
          %943 = vrot.lane.b32.xlu0 %v935, 122
          %v944 = vpop.permute.xlu0 %943
          %945 = vrot.lane.b32.xlu0 %v938, 122
          %v946 = vpop.permute.xlu0 %945
          %947 = vrot.lane.b32.xlu0 %v940, 122
          %v948 = vpop.permute.xlu0 %947
          %949 = vrot.lane.b32.xlu0 %v942, 122
          %v950 = vpop.permute.xlu0 %949
          %v951 = vsel %vm458, %v944, %v946
          %v952 = vsel %vm458, %v948, %v950
          %v955 = vadd.f32 %v918, %v951
          %v956 = vadd.f32 %v919, %v952
          %v957 = vld [vmem:[#allocation3] sm:$0xf8]
          %v958 = vld [vmem:[#allocation3 + $0x20] sm:$0x7]
          %v959 = vstv %s284
          %v960 = vmul.f32 %v959, %v957
          %v961 = vmul.f32 %v959, %v313
          %v962 = vmul.f32 %v959, %v958
          %vm966 = vcmask 1044480
          %v967 = vrot.slane %v960, 3
          %v968 = vrot.slane %v961, 3
          %v969 = vsel %vm966, %v967, %v968
          %v970 = vrot.slane %v962, 3
          %v971 = vsel %vm966, %v968, %v970
          %v974 = vadd.f32 %v955, %v969
          %v975 = vadd.f32 %v956, %v971
          %v976 = vld [vmem:[#allocation3] sm:$0xf8]
          %v977 = vld [vmem:[#allocation3 + $0x8] sm:$0xf8]
          %v978 = vld [vmem:[#allocation3 + $0x20] sm:$0x7]
          %v979 = vld [vmem:[#allocation3 + $0x28] sm:$0x7]
          %v980 = vstv %s285
          %v981 = vmul.f32 %v980, %v976
          %v982 = vmul.f32 %v980, %v977
          %v983 = vmul.f32 %v980, %v486
          %v984 = vmul.f32 %v980, %v487
          %v985 = vmul.f32 %v980, %v978
          %v986 = vmul.f32 %v980, %v979
          %v993 = vrot.slane %v981, 3
          %v994 = vrot.slane %v983, 3
          %v995 = vsel %vm966, %v993, %v994
          %v996 = vrot.slane %v982, 3
          %v997 = vrot.slane %v984, 3
          %v998 = vsel %vm966, %v996, %v997
          %v999 = vrot.slane %v985, 3
          %v1000 = vsel %vm966, %v994, %v999
          %v1001 = vrot.slane %v986, 3
          %v1002 = vsel %vm966, %v997, %v1001
          %1003 = vrot.lane.b32.xlu0 %v995, 127
          %v1004 = vpop.permute.xlu0 %1003
          %1005 = vrot.lane.b32.xlu0 %v998, 127
          %v1006 = vpop.permute.xlu0 %1005
          %1007 = vrot.lane.b32.xlu0 %v1000, 127
          %v1008 = vpop.permute.xlu0 %1007
          %1009 = vrot.lane.b32.xlu0 %v1002, 127
          %v1010 = vpop.permute.xlu0 %1009
          %v1011 = vsel %vm338, %v1004, %v1006
          %v1012 = vsel %vm338, %v1008, %v1010
          %v1015 = vadd.f32 %v974, %v1011
          %v1016 = vadd.f32 %v975, %v1012
          %v1017 = vstv %s286
          %v1018 = vmul.f32 %v1017, %v976
          %v1019 = vmul.f32 %v1017, %v977
          %v1020 = vmul.f32 %v1017, %v486
          %v1021 = vmul.f32 %v1017, %v487
          %v1022 = vmul.f32 %v1017, %v978
          %v1023 = vmul.f32 %v1017, %v979
          %v1030 = vrot.slane %v1018, 3
          %v1031 = vrot.slane %v1020, 3
          %v1032 = vsel %vm966, %v1030, %v1031
          %v1033 = vrot.slane %v1019, 3
          %v1034 = vrot.slane %v1021, 3
          %v1035 = vsel %vm966, %v1033, %v1034
          %v1036 = vrot.slane %v1022, 3
          %v1037 = vsel %vm966, %v1031, %v1036
          %v1038 = vrot.slane %v1023, 3
          %v1039 = vsel %vm966, %v1034, %v1038
          %1040 = vrot.lane.b32.xlu0 %v1032, 126
          %v1041 = vpop.permute.xlu0 %1040
          %1042 = vrot.lane.b32.xlu0 %v1035, 126
          %v1043 = vpop.permute.xlu0 %1042
          %1044 = vrot.lane.b32.xlu0 %v1037, 126
          %v1045 = vpop.permute.xlu0 %1044
          %1046 = vrot.lane.b32.xlu0 %v1039, 126
          %v1047 = vpop.permute.xlu0 %1046
          %v1048 = vsel %vm362, %v1041, %v1043
          %v1049 = vsel %vm362, %v1045, %v1047
          %v1052 = vadd.f32 %v1015, %v1048
          %v1053 = vadd.f32 %v1016, %v1049
          %v1054 = vstv %s287
          %v1055 = vmul.f32 %v1054, %v976
          %v1056 = vmul.f32 %v1054, %v977
          %v1057 = vmul.f32 %v1054, %v486
          %v1058 = vmul.f32 %v1054, %v487
          %v1059 = vmul.f32 %v1054, %v978
          %v1060 = vmul.f32 %v1054, %v979
          %v1067 = vrot.slane %v1055, 3
          %v1068 = vrot.slane %v1057, 3
          %v1069 = vsel %vm966, %v1067, %v1068
          %v1070 = vrot.slane %v1056, 3
          %v1071 = vrot.slane %v1058, 3
          %v1072 = vsel %vm966, %v1070, %v1071
          %v1073 = vrot.slane %v1059, 3
          %v1074 = vsel %vm966, %v1068, %v1073
          %v1075 = vrot.slane %v1060, 3
          %v1076 = vsel %vm966, %v1071, %v1075
          %1077 = vrot.lane.b32.xlu0 %v1069, 125
          %v1078 = vpop.permute.xlu0 %1077
          %1079 = vrot.lane.b32.xlu0 %v1072, 125
          %v1080 = vpop.permute.xlu0 %1079
          %1081 = vrot.lane.b32.xlu0 %v1074, 125
          %v1082 = vpop.permute.xlu0 %1081
          %1083 = vrot.lane.b32.xlu0 %v1076, 125
          %v1084 = vpop.permute.xlu0 %1083
          %v1085 = vsel %vm386, %v1078, %v1080
          %v1086 = vsel %vm386, %v1082, %v1084
          %v1089 = vadd.f32 %v1052, %v1085
          %v1090 = vadd.f32 %v1053, %v1086
          %v1091 = vstv %s288
          %v1092 = vmul.f32 %v1091, %v976
          %v1093 = vmul.f32 %v1091, %v977
          %v1094 = vmul.f32 %v1091, %v486
          %v1095 = vmul.f32 %v1091, %v487
          %v1096 = vmul.f32 %v1091, %v978
          %v1097 = vmul.f32 %v1091, %v979
          %v1104 = vrot.slane %v1092, 3
          %v1105 = vrot.slane %v1094, 3
          %v1106 = vsel %vm966, %v1104, %v1105
          %v1107 = vrot.slane %v1093, 3
          %v1108 = vrot.slane %v1095, 3
          %v1109 = vsel %vm966, %v1107, %v1108
          %v1110 = vrot.slane %v1096, 3
          %v1111 = vsel %vm966, %v1105, %v1110
          %v1112 = vrot.slane %v1097, 3
          %v1113 = vsel %vm966, %v1108, %v1112
          %1114 = vrot.lane.b32.xlu0 %v1106, 124
          %v1115 = vpop.permute.xlu0 %1114
          %1116 = vrot.lane.b32.xlu0 %v1109, 124
          %v1117 = vpop.permute.xlu0 %1116
          %1118 = vrot.lane.b32.xlu0 %v1111, 124
          %v1119 = vpop.permute.xlu0 %1118
          %1120 = vrot.lane.b32.xlu0 %v1113, 124
          %v1121 = vpop.permute.xlu0 %1120
          %v1122 = vsel %vm410, %v1115, %v1117
          %v1123 = vsel %vm410, %v1119, %v1121
          %v1126 = vadd.f32 %v1089, %v1122
          %v1127 = vadd.f32 %v1090, %v1123
          %v1128 = vstv %s289
          %v1129 = vmul.f32 %v1128, %v976
          %v1130 = vmul.f32 %v1128, %v977
          %v1131 = vmul.f32 %v1128, %v486
          %v1132 = vmul.f32 %v1128, %v487
          %v1133 = vmul.f32 %v1128, %v978
          %v1134 = vmul.f32 %v1128, %v979
          %v1141 = vrot.slane %v1129, 3
          %v1142 = vrot.slane %v1131, 3
          %v1143 = vsel %vm966, %v1141, %v1142
          %v1144 = vrot.slane %v1130, 3
          %v1145 = vrot.slane %v1132, 3
          %v1146 = vsel %vm966, %v1144, %v1145
          %v1147 = vrot.slane %v1133, 3
          %v1148 = vsel %vm966, %v1142, %v1147
          %v1149 = vrot.slane %v1134, 3
          %v1150 = vsel %vm966, %v1145, %v1149
          %1151 = vrot.lane.b32.xlu0 %v1143, 123
          %v1152 = vpop.permute.xlu0 %1151
          %1153 = vrot.lane.b32.xlu0 %v1146, 123
          %v1154 = vpop.permute.xlu0 %1153
          %1155 = vrot.lane.b32.xlu0 %v1148, 123
          %v1156 = vpop.permute.xlu0 %1155
          %1157 = vrot.lane.b32.xlu0 %v1150, 123
          %v1158 = vpop.permute.xlu0 %1157
          %v1159 = vsel %vm434, %v1152, %v1154
          %v1160 = vsel %vm434, %v1156, %v1158
          %v1163 = vadd.f32 %v1126, %v1159
          %v1164 = vadd.f32 %v1127, %v1160
          %v1165 = vstv %s290
          %v1166 = vmul.f32 %v1165, %v976
          %v1167 = vmul.f32 %v1165, %v977
          %v1168 = vmul.f32 %v1165, %v486
          %v1169 = vmul.f32 %v1165, %v487
          %v1170 = vmul.f32 %v1165, %v978
          %v1171 = vmul.f32 %v1165, %v979
          %v1178 = vrot.slane %v1166, 3
          %v1179 = vrot.slane %v1168, 3
          %v1180 = vsel %vm966, %v1178, %v1179
          %v1181 = vrot.slane %v1167, 3
          %v1182 = vrot.slane %v1169, 3
          %v1183 = vsel %vm966, %v1181, %v1182
          %v1184 = vrot.slane %v1170, 3
          %v1185 = vsel %vm966, %v1179, %v1184
          %v1186 = vrot.slane %v1171, 3
          %v1187 = vsel %vm966, %v1182, %v1186
          %1188 = vrot.lane.b32.xlu0 %v1180, 122
          %v1189 = vpop.permute.xlu0 %1188
          %1190 = vrot.lane.b32.xlu0 %v1183, 122
          %v1191 = vpop.permute.xlu0 %1190
          %1192 = vrot.lane.b32.xlu0 %v1185, 122
          %v1193 = vpop.permute.xlu0 %1192
          %1194 = vrot.lane.b32.xlu0 %v1187, 122
          %v1195 = vpop.permute.xlu0 %1194
          %v1196 = vsel %vm458, %v1189, %v1191
          %v1197 = vsel %vm458, %v1193, %v1195
          %v1200 = vadd.f32 %v1163, %v1196
          %v1201 = vadd.f32 %v1164, %v1197
          %v1202 = vld [vmem:[#allocation3] sm:$0xf0]
          %v1203 = vld [vmem:[#allocation3 + $0x20] sm:$0xf]
          %v1204 = vstv %s291
          %v1205 = vmul.f32 %v1204, %v1202
          %v1206 = vmul.f32 %v1204, %v313
          %v1207 = vmul.f32 %v1204, %v1203
          %vm1211 = vcmask 1043456
          %v1212 = vrot.slane %v1205, 4
          %v1213 = vrot.slane %v1206, 4
          %v1214 = vsel %vm1211, %v1212, %v1213
          %v1215 = vrot.slane %v1207, 4
          %v1216 = vsel %vm1211, %v1213, %v1215
          %v1219 = vadd.f32 %v1200, %v1214
          %v1220 = vadd.f32 %v1201, %v1216
          %v1221 = vld [vmem:[#allocation3] sm:$0xf0]
          %v1222 = vld [vmem:[#allocation3 + $0x8] sm:$0xf0]
          %v1223 = vld [vmem:[#allocation3 + $0x20] sm:$0xf]
          %v1224 = vld [vmem:[#allocation3 + $0x28] sm:$0xf]
          %v1225 = vstv %s292
          %v1226 = vmul.f32 %v1225, %v1221
          %v1227 = vmul.f32 %v1225, %v1222
          %v1228 = vmul.f32 %v1225, %v486
          %v1229 = vmul.f32 %v1225, %v487
          %v1230 = vmul.f32 %v1225, %v1223
          %v1231 = vmul.f32 %v1225, %v1224
          %v1238 = vrot.slane %v1226, 4
          %v1239 = vrot.slane %v1228, 4
          %v1240 = vsel %vm1211, %v1238, %v1239
          %v1241 = vrot.slane %v1227, 4
          %v1242 = vrot.slane %v1229, 4
          %v1243 = vsel %vm1211, %v1241, %v1242
          %v1244 = vrot.slane %v1230, 4
          %v1245 = vsel %vm1211, %v1239, %v1244
          %v1246 = vrot.slane %v1231, 4
          %v1247 = vsel %vm1211, %v1242, %v1246
          %1248 = vrot.lane.b32.xlu0 %v1240, 127
          %v1249 = vpop.permute.xlu0 %1248
          %1250 = vrot.lane.b32.xlu0 %v1243, 127
          %v1251 = vpop.permute.xlu0 %1250
          %1252 = vrot.lane.b32.xlu0 %v1245, 127
          %v1253 = vpop.permute.xlu0 %1252
          %1254 = vrot.lane.b32.xlu0 %v1247, 127
          %v1255 = vpop.permute.xlu0 %1254
          %v1256 = vsel %vm338, %v1249, %v1251
          %v1257 = vsel %vm338, %v1253, %v1255
          %v1260 = vadd.f32 %v1219, %v1256
          %v1261 = vadd.f32 %v1220, %v1257
          %v1262 = vstv %s293
          %v1263 = vmul.f32 %v1262, %v1221
          %v1264 = vmul.f32 %v1262, %v1222
          %v1265 = vmul.f32 %v1262, %v486
          %v1266 = vmul.f32 %v1262, %v487
          %v1267 = vmul.f32 %v1262, %v1223
          %v1268 = vmul.f32 %v1262, %v1224
          %v1275 = vrot.slane %v1263, 4
          %v1276 = vrot.slane %v1265, 4
          %v1277 = vsel %vm1211, %v1275, %v1276
          %v1278 = vrot.slane %v1264, 4
          %v1279 = vrot.slane %v1266, 4
          %v1280 = vsel %vm1211, %v1278, %v1279
          %v1281 = vrot.slane %v1267, 4
          %v1282 = vsel %vm1211, %v1276, %v1281
          %v1283 = vrot.slane %v1268, 4
          %v1284 = vsel %vm1211, %v1279, %v1283
          %1285 = vrot.lane.b32.xlu0 %v1277, 126
          %v1286 = vpop.permute.xlu0 %1285
          %1287 = vrot.lane.b32.xlu0 %v1280, 126
          %v1288 = vpop.permute.xlu0 %1287
          %1289 = vrot.lane.b32.xlu0 %v1282, 126
          %v1290 = vpop.permute.xlu0 %1289
          %1291 = vrot.lane.b32.xlu0 %v1284, 126
          %v1292 = vpop.permute.xlu0 %1291
          %v1293 = vsel %vm362, %v1286, %v1288
          %v1294 = vsel %vm362, %v1290, %v1292
          %v1297 = vadd.f32 %v1260, %v1293
          %v1298 = vadd.f32 %v1261, %v1294
          %v1299 = vstv %s294
          %v1300 = vmul.f32 %v1299, %v1221
          %v1301 = vmul.f32 %v1299, %v1222
          %v1302 = vmul.f32 %v1299, %v486
          %v1303 = vmul.f32 %v1299, %v487
          %v1304 = vmul.f32 %v1299, %v1223
          %v1305 = vmul.f32 %v1299, %v1224
          %v1312 = vrot.slane %v1300, 4
          %v1313 = vrot.slane %v1302, 4
          %v1314 = vsel %vm1211, %v1312, %v1313
          %v1315 = vrot.slane %v1301, 4
          %v1316 = vrot.slane %v1303, 4
          %v1317 = vsel %vm1211, %v1315, %v1316
          %v1318 = vrot.slane %v1304, 4
          %v1319 = vsel %vm1211, %v1313, %v1318
          %v1320 = vrot.slane %v1305, 4
          %v1321 = vsel %vm1211, %v1316, %v1320
          %1322 = vrot.lane.b32.xlu0 %v1314, 125
          %v1323 = vpop.permute.xlu0 %1322
          %1324 = vrot.lane.b32.xlu0 %v1317, 125
          %v1325 = vpop.permute.xlu0 %1324
          %1326 = vrot.lane.b32.xlu0 %v1319, 125
          %v1327 = vpop.permute.xlu0 %1326
          %1328 = vrot.lane.b32.xlu0 %v1321, 125
          %v1329 = vpop.permute.xlu0 %1328
          %v1330 = vsel %vm386, %v1323, %v1325
          %v1331 = vsel %vm386, %v1327, %v1329
          %v1334 = vadd.f32 %v1297, %v1330
          %v1335 = vadd.f32 %v1298, %v1331
          %v1336 = vstv %s295
          %v1337 = vmul.f32 %v1336, %v1221
          %v1338 = vmul.f32 %v1336, %v1222
          %v1339 = vmul.f32 %v1336, %v486
          %v1340 = vmul.f32 %v1336, %v487
          %v1341 = vmul.f32 %v1336, %v1223
          %v1342 = vmul.f32 %v1336, %v1224
          %v1349 = vrot.slane %v1337, 4
          %v1350 = vrot.slane %v1339, 4
          %v1351 = vsel %vm1211, %v1349, %v1350
          %v1352 = vrot.slane %v1338, 4
          %v1353 = vrot.slane %v1340, 4
          %v1354 = vsel %vm1211, %v1352, %v1353
          %v1355 = vrot.slane %v1341, 4
          %v1356 = vsel %vm1211, %v1350, %v1355
          %v1357 = vrot.slane %v1342, 4
          %v1358 = vsel %vm1211, %v1353, %v1357
          %1359 = vrot.lane.b32.xlu0 %v1351, 124
          %v1360 = vpop.permute.xlu0 %1359
          %1361 = vrot.lane.b32.xlu0 %v1354, 124
          %v1362 = vpop.permute.xlu0 %1361
          %1363 = vrot.lane.b32.xlu0 %v1356, 124
          %v1364 = vpop.permute.xlu0 %1363
          %1365 = vrot.lane.b32.xlu0 %v1358, 124
          %v1366 = vpop.permute.xlu0 %1365
          %v1367 = vsel %vm410, %v1360, %v1362
          %v1368 = vsel %vm410, %v1364, %v1366
          %v1371 = vadd.f32 %v1334, %v1367
          %v1372 = vadd.f32 %v1335, %v1368
          %v1373 = vstv %s296
          %v1374 = vmul.f32 %v1373, %v1221
          %v1375 = vmul.f32 %v1373, %v1222
          %v1376 = vmul.f32 %v1373, %v486
          %v1377 = vmul.f32 %v1373, %v487
          %v1378 = vmul.f32 %v1373, %v1223
          %v1379 = vmul.f32 %v1373, %v1224
          %v1386 = vrot.slane %v1374, 4
          %v1387 = vrot.slane %v1376, 4
          %v1388 = vsel %vm1211, %v1386, %v1387
          %v1389 = vrot.slane %v1375, 4
          %v1390 = vrot.slane %v1377, 4
          %v1391 = vsel %vm1211, %v1389, %v1390
          %v1392 = vrot.slane %v1378, 4
          %v1393 = vsel %vm1211, %v1387, %v1392
          %v1394 = vrot.slane %v1379, 4
          %v1395 = vsel %vm1211, %v1390, %v1394
          %1396 = vrot.lane.b32.xlu0 %v1388, 123
          %v1397 = vpop.permute.xlu0 %1396
          %1398 = vrot.lane.b32.xlu0 %v1391, 123
          %v1399 = vpop.permute.xlu0 %1398
          %1400 = vrot.lane.b32.xlu0 %v1393, 123
          %v1401 = vpop.permute.xlu0 %1400
          %1402 = vrot.lane.b32.xlu0 %v1395, 123
          %v1403 = vpop.permute.xlu0 %1402
          %v1404 = vsel %vm434, %v1397, %v1399
          %v1405 = vsel %vm434, %v1401, %v1403
          %v1408 = vadd.f32 %v1371, %v1404
          %v1409 = vadd.f32 %v1372, %v1405
          %v1410 = vstv %s297
          %v1411 = vmul.f32 %v1410, %v1221
          %v1412 = vmul.f32 %v1410, %v1222
          %v1413 = vmul.f32 %v1410, %v486
          %v1414 = vmul.f32 %v1410, %v487
          %v1415 = vmul.f32 %v1410, %v1223
          %v1416 = vmul.f32 %v1410, %v1224
          %v1423 = vrot.slane %v1411, 4
          %v1424 = vrot.slane %v1413, 4
          %v1425 = vsel %vm1211, %v1423, %v1424
          %v1426 = vrot.slane %v1412, 4
          %v1427 = vrot.slane %v1414, 4
          %v1428 = vsel %vm1211, %v1426, %v1427
          %v1429 = vrot.slane %v1415, 4
          %v1430 = vsel %vm1211, %v1424, %v1429
          %v1431 = vrot.slane %v1416, 4
          %v1432 = vsel %vm1211, %v1427, %v1431
          %1433 = vrot.lane.b32.xlu0 %v1425, 122
          %v1434 = vpop.permute.xlu0 %1433
          %1435 = vrot.lane.b32.xlu0 %v1428, 122
          %v1436 = vpop.permute.xlu0 %1435
          %1437 = vrot.lane.b32.xlu0 %v1430, 122
          %v1438 = vpop.permute.xlu0 %1437
          %1439 = vrot.lane.b32.xlu0 %v1432, 122
          %v1440 = vpop.permute.xlu0 %1439
          %v1441 = vsel %vm458, %v1434, %v1436
          %v1442 = vsel %vm458, %v1438, %v1440
          %v1445 = vadd.f32 %v1408, %v1441
          %v1446 = vadd.f32 %v1409, %v1442
          %v1447 = vld [vmem:[#allocation3] sm:$0xe0]
          %v1448 = vld [vmem:[#allocation3 + $0x20] sm:$0x1f]
          %v1449 = vstv %s298
          %v1450 = vmul.f32 %v1449, %v1447
          %v1451 = vmul.f32 %v1449, %v313
          %v1452 = vmul.f32 %v1449, %v1448
          %v1456 = vrot.slane %v1450, 5
          %v1457 = vrot.slane %v1451, 5
          %v1458 = vsel %vm244, %v1456, %v1457
          %v1459 = vrot.slane %v1452, 5
          %v1460 = vsel %vm244, %v1457, %v1459
          %v1463 = vadd.f32 %v1445, %v1458
          %v1464 = vadd.f32 %v1446, %v1460
          %v1465 = vld [vmem:[#allocation3] sm:$0xe0]
          %v1466 = vld [vmem:[#allocation3 + $0x8] sm:$0xe0]
          %v1467 = vld [vmem:[#allocation3 + $0x20] sm:$0x1f]
          %v1468 = vld [vmem:[#allocation3 + $0x28] sm:$0x1f]
          %v1469 = vstv %s299
          %v1470 = vmul.f32 %v1469, %v1465
          %v1471 = vmul.f32 %v1469, %v1466
          %v1472 = vmul.f32 %v1469, %v486
          %v1473 = vmul.f32 %v1469, %v487
          %v1474 = vmul.f32 %v1469, %v1467
          %v1475 = vmul.f32 %v1469, %v1468
          %v1482 = vrot.slane %v1470, 5
          %v1483 = vrot.slane %v1472, 5
          %v1484 = vsel %vm244, %v1482, %v1483
          %v1485 = vrot.slane %v1471, 5
          %v1486 = vrot.slane %v1473, 5
          %v1487 = vsel %vm244, %v1485, %v1486
          %v1488 = vrot.slane %v1474, 5
          %v1489 = vsel %vm244, %v1483, %v1488
          %v1490 = vrot.slane %v1475, 5
          %v1491 = vsel %vm244, %v1486, %v1490
          %1492 = vrot.lane.b32.xlu0 %v1484, 127
          %v1493 = vpop.permute.xlu0 %1492
          %1494 = vrot.lane.b32.xlu0 %v1487, 127
          %v1495 = vpop.permute.xlu0 %1494
          %1496 = vrot.lane.b32.xlu0 %v1489, 127
          %v1497 = vpop.permute.xlu0 %1496
          %1498 = vrot.lane.b32.xlu0 %v1491, 127
          %v1499 = vpop.permute.xlu0 %1498
          %v1500 = vsel %vm338, %v1493, %v1495
          %v1501 = vsel %vm338, %v1497, %v1499
          %v1504 = vadd.f32 %v1463, %v1500
          %v1505 = vadd.f32 %v1464, %v1501
          %v1506 = vstv %s300
          %v1507 = vmul.f32 %v1506, %v1465
          %v1508 = vmul.f32 %v1506, %v1466
          %v1509 = vmul.f32 %v1506, %v486
          %v1510 = vmul.f32 %v1506, %v487
          %v1511 = vmul.f32 %v1506, %v1467
          %v1512 = vmul.f32 %v1506, %v1468
          %v1519 = vrot.slane %v1507, 5
          %v1520 = vrot.slane %v1509, 5
          %v1521 = vsel %vm244, %v1519, %v1520
          %v1522 = vrot.slane %v1508, 5
          %v1523 = vrot.slane %v1510, 5
          %v1524 = vsel %vm244, %v1522, %v1523
          %v1525 = vrot.slane %v1511, 5
          %v1526 = vsel %vm244, %v1520, %v1525
          %v1527 = vrot.slane %v1512, 5
          %v1528 = vsel %vm244, %v1523, %v1527
          %1529 = vrot.lane.b32.xlu0 %v1521, 126
          %v1530 = vpop.permute.xlu0 %1529
          %1531 = vrot.lane.b32.xlu0 %v1524, 126
          %v1532 = vpop.permute.xlu0 %1531
          %1533 = vrot.lane.b32.xlu0 %v1526, 126
          %v1534 = vpop.permute.xlu0 %1533
          %1535 = vrot.lane.b32.xlu0 %v1528, 126
          %v1536 = vpop.permute.xlu0 %1535
          %v1537 = vsel %vm362, %v1530, %v1532
          %v1538 = vsel %vm362, %v1534, %v1536
          %v1541 = vadd.f32 %v1504, %v1537
          %v1542 = vadd.f32 %v1505, %v1538
          %v1543 = vstv %s301
          %v1544 = vmul.f32 %v1543, %v1465
          %v1545 = vmul.f32 %v1543, %v1466
          %v1546 = vmul.f32 %v1543, %v486
          %v1547 = vmul.f32 %v1543, %v487
          %v1548 = vmul.f32 %v1543, %v1467
          %v1549 = vmul.f32 %v1543, %v1468
          %v1556 = vrot.slane %v1544, 5
          %v1557 = vrot.slane %v1546, 5
          %v1558 = vsel %vm244, %v1556, %v1557
          %v1559 = vrot.slane %v1545, 5
          %v1560 = vrot.slane %v1547, 5
          %v1561 = vsel %vm244, %v1559, %v1560
          %v1562 = vrot.slane %v1548, 5
          %v1563 = vsel %vm244, %v1557, %v1562
          %v1564 = vrot.slane %v1549, 5
          %v1565 = vsel %vm244, %v1560, %v1564
          %1566 = vrot.lane.b32.xlu0 %v1558, 125
          %v1567 = vpop.permute.xlu0 %1566
          %1568 = vrot.lane.b32.xlu0 %v1561, 125
          %v1569 = vpop.permute.xlu0 %1568
          %1570 = vrot.lane.b32.xlu0 %v1563, 125
          %v1571 = vpop.permute.xlu0 %1570
          %1572 = vrot.lane.b32.xlu0 %v1565, 125
          %v1573 = vpop.permute.xlu0 %1572
          %v1574 = vsel %vm386, %v1567, %v1569
          %v1575 = vsel %vm386, %v1571, %v1573
          %v1578 = vadd.f32 %v1541, %v1574
          %v1579 = vadd.f32 %v1542, %v1575
          %v1580 = vstv %s302
          %v1581 = vmul.f32 %v1580, %v1465
          %v1582 = vmul.f32 %v1580, %v1466
          %v1583 = vmul.f32 %v1580, %v486
          %v1584 = vmul.f32 %v1580, %v487
          %v1585 = vmul.f32 %v1580, %v1467
          %v1586 = vmul.f32 %v1580, %v1468
          %v1593 = vrot.slane %v1581, 5
          %v1594 = vrot.slane %v1583, 5
          %v1595 = vsel %vm244, %v1593, %v1594
          %v1596 = vrot.slane %v1582, 5
          %v1597 = vrot.slane %v1584, 5
          %v1598 = vsel %vm244, %v1596, %v1597
          %v1599 = vrot.slane %v1585, 5
          %v1600 = vsel %vm244, %v1594, %v1599
          %v1601 = vrot.slane %v1586, 5
          %v1602 = vsel %vm244, %v1597, %v1601
          %1603 = vrot.lane.b32.xlu0 %v1595, 124
          %v1604 = vpop.permute.xlu0 %1603
          %1605 = vrot.lane.b32.xlu0 %v1598, 124
          %v1606 = vpop.permute.xlu0 %1605
          %1607 = vrot.lane.b32.xlu0 %v1600, 124
          %v1608 = vpop.permute.xlu0 %1607
          %1609 = vrot.lane.b32.xlu0 %v1602, 124
          %v1610 = vpop.permute.xlu0 %1609
          %v1611 = vsel %vm410, %v1604, %v1606
          %v1612 = vsel %vm410, %v1608, %v1610
          %v1615 = vadd.f32 %v1578, %v1611
          %v1616 = vadd.f32 %v1579, %v1612
          %v1617 = vstv %s303
          %v1618 = vmul.f32 %v1617, %v1465
          %v1619 = vmul.f32 %v1617, %v1466
          %v1620 = vmul.f32 %v1617, %v486
          %v1621 = vmul.f32 %v1617, %v487
          %v1622 = vmul.f32 %v1617, %v1467
          %v1623 = vmul.f32 %v1617, %v1468
          %v1630 = vrot.slane %v1618, 5
          %v1631 = vrot.slane %v1620, 5
          %v1632 = vsel %vm244, %v1630, %v1631
          %v1633 = vrot.slane %v1619, 5
          %v1634 = vrot.slane %v1621, 5
          %v1635 = vsel %vm244, %v1633, %v1634
          %v1636 = vrot.slane %v1622, 5
          %v1637 = vsel %vm244, %v1631, %v1636
          %v1638 = vrot.slane %v1623, 5
          %v1639 = vsel %vm244, %v1634, %v1638
          %1640 = vrot.lane.b32.xlu0 %v1632, 123
          %v1641 = vpop.permute.xlu0 %1640
          %1642 = vrot.lane.b32.xlu0 %v1635, 123
          %v1643 = vpop.permute.xlu0 %1642
          %1644 = vrot.lane.b32.xlu0 %v1637, 123
          %v1645 = vpop.permute.xlu0 %1644
          %1646 = vrot.lane.b32.xlu0 %v1639, 123
          %v1647 = vpop.permute.xlu0 %1646
          %v1648 = vsel %vm434, %v1641, %v1643
          %v1649 = vsel %vm434, %v1645, %v1647
          %v1652 = vadd.f32 %v1615, %v1648
          %v1653 = vadd.f32 %v1616, %v1649
          %v1654 = vstv %s304
          %v1655 = vmul.f32 %v1654, %v1465
          %v1656 = vmul.f32 %v1654, %v1466
          %v1657 = vmul.f32 %v1654, %v486
          %v1658 = vmul.f32 %v1654, %v487
          %v1659 = vmul.f32 %v1654, %v1467
          %v1660 = vmul.f32 %v1654, %v1468
          %v1667 = vrot.slane %v1655, 5
          %v1668 = vrot.slane %v1657, 5
          %v1669 = vsel %vm244, %v1667, %v1668
          %v1670 = vrot.slane %v1656, 5
          %v1671 = vrot.slane %v1658, 5
          %v1672 = vsel %vm244, %v1670, %v1671
          %v1673 = vrot.slane %v1659, 5
          %v1674 = vsel %vm244, %v1668, %v1673
          %v1675 = vrot.slane %v1660, 5
          %v1676 = vsel %vm244, %v1671, %v1675
          %1677 = vrot.lane.b32.xlu0 %v1669, 122
          %v1678 = vpop.permute.xlu0 %1677
          %1679 = vrot.lane.b32.xlu0 %v1672, 122
          %v1680 = vpop.permute.xlu0 %1679
          %1681 = vrot.lane.b32.xlu0 %v1674, 122
          %v1682 = vpop.permute.xlu0 %1681
          %1683 = vrot.lane.b32.xlu0 %v1676, 122
          %v1684 = vpop.permute.xlu0 %1683
          %v1685 = vsel %vm458, %v1678, %v1680
          %v1686 = vsel %vm458, %v1682, %v1684
          %v1689 = vadd.f32 %v1652, %v1685
          %v1690 = vadd.f32 %v1653, %v1686
          %v1691 = vld [vmem:[#allocation3] sm:$0xc0]
          %v1692 = vld [vmem:[#allocation3 + $0x20] sm:$0x3f]
          %v1693 = vstv %s305
          %v1694 = vmul.f32 %v1693, %v1691
          %v1695 = vmul.f32 %v1693, %v313
          %v1696 = vmul.f32 %v1693, %v1692
          %vm1700 = vcmask 1041408
          %v1701 = vrot.slane %v1694, 6
          %v1702 = vrot.slane %v1695, 6
          %v1703 = vsel %vm1700, %v1701, %v1702
          %v1704 = vrot.slane %v1696, 6
          %v1705 = vsel %vm1700, %v1702, %v1704
          %v1708 = vadd.f32 %v1689, %v1703
          %v1709 = vadd.f32 %v1690, %v1705
          %v1710 = vld [vmem:[#allocation3] sm:$0xc0]
          %v1711 = vld [vmem:[#allocation3 + $0x8] sm:$0xc0]
          %v1712 = vld [vmem:[#allocation3 + $0x20] sm:$0x3f]
          %v1713 = vld [vmem:[#allocation3 + $0x28] sm:$0x3f]
          %v1714 = vstv %s306
          %v1715 = vmul.f32 %v1714, %v1710
          %v1716 = vmul.f32 %v1714, %v1711
          %v1717 = vmul.f32 %v1714, %v486
          %v1718 = vmul.f32 %v1714, %v487
          %v1719 = vmul.f32 %v1714, %v1712
          %v1720 = vmul.f32 %v1714, %v1713
          %v1727 = vrot.slane %v1715, 6
          %v1728 = vrot.slane %v1717, 6
          %v1729 = vsel %vm1700, %v1727, %v1728
          %v1730 = vrot.slane %v1716, 6
          %v1731 = vrot.slane %v1718, 6
          %v1732 = vsel %vm1700, %v1730, %v1731
          %v1733 = vrot.slane %v1719, 6
          %v1734 = vsel %vm1700, %v1728, %v1733
          %v1735 = vrot.slane %v1720, 6
          %v1736 = vsel %vm1700, %v1731, %v1735
          %1737 = vrot.lane.b32.xlu0 %v1729, 127
          %v1738 = vpop.permute.xlu0 %1737
          %1739 = vrot.lane.b32.xlu0 %v1732, 127
          %v1740 = vpop.permute.xlu0 %1739
          %1741 = vrot.lane.b32.xlu0 %v1734, 127
          %v1742 = vpop.permute.xlu0 %1741
          %1743 = vrot.lane.b32.xlu0 %v1736, 127
          %v1744 = vpop.permute.xlu0 %1743
          %v1745 = vsel %vm338, %v1738, %v1740
          %v1746 = vsel %vm338, %v1742, %v1744
          %v1749 = vadd.f32 %v1708, %v1745
          %v1750 = vadd.f32 %v1709, %v1746
          %v1751 = vstv %s307
          %v1752 = vmul.f32 %v1751, %v1710
          %v1753 = vmul.f32 %v1751, %v1711
          %v1754 = vmul.f32 %v1751, %v486
          %v1755 = vmul.f32 %v1751, %v487
          %v1756 = vmul.f32 %v1751, %v1712
          %v1757 = vmul.f32 %v1751, %v1713
          %v1764 = vrot.slane %v1752, 6
          %v1765 = vrot.slane %v1754, 6
          %v1766 = vsel %vm1700, %v1764, %v1765
          %v1767 = vrot.slane %v1753, 6
          %v1768 = vrot.slane %v1755, 6
          %v1769 = vsel %vm1700, %v1767, %v1768
          %v1770 = vrot.slane %v1756, 6
          %v1771 = vsel %vm1700, %v1765, %v1770
          %v1772 = vrot.slane %v1757, 6
          %v1773 = vsel %vm1700, %v1768, %v1772
          %1774 = vrot.lane.b32.xlu0 %v1766, 126
          %v1775 = vpop.permute.xlu0 %1774
          %1776 = vrot.lane.b32.xlu0 %v1769, 126
          %v1777 = vpop.permute.xlu0 %1776
          %1778 = vrot.lane.b32.xlu0 %v1771, 126
          %v1779 = vpop.permute.xlu0 %1778
          %1780 = vrot.lane.b32.xlu0 %v1773, 126
          %v1781 = vpop.permute.xlu0 %1780
          %v1782 = vsel %vm362, %v1775, %v1777
          %v1783 = vsel %vm362, %v1779, %v1781
          %v1786 = vadd.f32 %v1749, %v1782
          %v1787 = vadd.f32 %v1750, %v1783
          %v1788 = vstv %s308
          %v1789 = vmul.f32 %v1788, %v1710
          %v1790 = vmul.f32 %v1788, %v1711
          %v1791 = vmul.f32 %v1788, %v486
          %v1792 = vmul.f32 %v1788, %v487
          %v1793 = vmul.f32 %v1788, %v1712
          %v1794 = vmul.f32 %v1788, %v1713
          %v1801 = vrot.slane %v1789, 6
          %v1802 = vrot.slane %v1791, 6
          %v1803 = vsel %vm1700, %v1801, %v1802
          %v1804 = vrot.slane %v1790, 6
          %v1805 = vrot.slane %v1792, 6
          %v1806 = vsel %vm1700, %v1804, %v1805
          %v1807 = vrot.slane %v1793, 6
          %v1808 = vsel %vm1700, %v1802, %v1807
          %v1809 = vrot.slane %v1794, 6
          %v1810 = vsel %vm1700, %v1805, %v1809
          %1811 = vrot.lane.b32.xlu0 %v1803, 125
          %v1812 = vpop.permute.xlu0 %1811
          %1813 = vrot.lane.b32.xlu0 %v1806, 125
          %v1814 = vpop.permute.xlu0 %1813
          %1815 = vrot.lane.b32.xlu0 %v1808, 125
          %v1816 = vpop.permute.xlu0 %1815
          %1817 = vrot.lane.b32.xlu0 %v1810, 125
          %v1818 = vpop.permute.xlu0 %1817
          %v1819 = vsel %vm386, %v1812, %v1814
          %v1820 = vsel %vm386, %v1816, %v1818
          %v1823 = vadd.f32 %v1786, %v1819
          %v1824 = vadd.f32 %v1787, %v1820
          %v1825 = vstv %s309
          %v1826 = vmul.f32 %v1825, %v1710
          %v1827 = vmul.f32 %v1825, %v1711
          %v1828 = vmul.f32 %v1825, %v486
          %v1829 = vmul.f32 %v1825, %v487
          %v1830 = vmul.f32 %v1825, %v1712
          %v1831 = vmul.f32 %v1825, %v1713
          %v1838 = vrot.slane %v1826, 6
          %v1839 = vrot.slane %v1828, 6
          %v1840 = vsel %vm1700, %v1838, %v1839
          %v1841 = vrot.slane %v1827, 6
          %v1842 = vrot.slane %v1829, 6
          %v1843 = vsel %vm1700, %v1841, %v1842
          %v1844 = vrot.slane %v1830, 6
          %v1845 = vsel %vm1700, %v1839, %v1844
          %v1846 = vrot.slane %v1831, 6
          %v1847 = vsel %vm1700, %v1842, %v1846
          %1848 = vrot.lane.b32.xlu0 %v1840, 124
          %v1849 = vpop.permute.xlu0 %1848
          %1850 = vrot.lane.b32.xlu0 %v1843, 124
          %v1851 = vpop.permute.xlu0 %1850
          %1852 = vrot.lane.b32.xlu0 %v1845, 124
          %v1853 = vpop.permute.xlu0 %1852
          %1854 = vrot.lane.b32.xlu0 %v1847, 124
          %v1855 = vpop.permute.xlu0 %1854
          %v1856 = vsel %vm410, %v1849, %v1851
          %v1857 = vsel %vm410, %v1853, %v1855
          %v1860 = vadd.f32 %v1823, %v1856
          %v1861 = vadd.f32 %v1824, %v1857
          %v1862 = vstv %s310
          %v1863 = vmul.f32 %v1862, %v1710
          %v1864 = vmul.f32 %v1862, %v1711
          %v1865 = vmul.f32 %v1862, %v486
          %v1866 = vmul.f32 %v1862, %v487
          %v1867 = vmul.f32 %v1862, %v1712
          %v1868 = vmul.f32 %v1862, %v1713
          %v1875 = vrot.slane %v1863, 6
          %v1876 = vrot.slane %v1865, 6
          %v1877 = vsel %vm1700, %v1875, %v1876
          %v1878 = vrot.slane %v1864, 6
          %v1879 = vrot.slane %v1866, 6
          %v1880 = vsel %vm1700, %v1878, %v1879
          %v1881 = vrot.slane %v1867, 6
          %v1882 = vsel %vm1700, %v1876, %v1881
          %v1883 = vrot.slane %v1868, 6
          %v1884 = vsel %vm1700, %v1879, %v1883
          %1885 = vrot.lane.b32.xlu0 %v1877, 123
          %v1886 = vpop.permute.xlu0 %1885
          %1887 = vrot.lane.b32.xlu0 %v1880, 123
          %v1888 = vpop.permute.xlu0 %1887
          %1889 = vrot.lane.b32.xlu0 %v1882, 123
          %v1890 = vpop.permute.xlu0 %1889
          %1891 = vrot.lane.b32.xlu0 %v1884, 123
          %v1892 = vpop.permute.xlu0 %1891
          %v1893 = vsel %vm434, %v1886, %v1888
          %v1894 = vsel %vm434, %v1890, %v1892
          %v1897 = vadd.f32 %v1860, %v1893
          %v1898 = vadd.f32 %v1861, %v1894
          %v1899 = vstv %s311
          %v1900 = vmul.f32 %v1899, %v1710
          %v1901 = vmul.f32 %v1899, %v1711
          %v1902 = vmul.f32 %v1899, %v486
          %v1903 = vmul.f32 %v1899, %v487
          %v1904 = vmul.f32 %v1899, %v1712
          %v1905 = vmul.f32 %v1899, %v1713
          %v1912 = vrot.slane %v1900, 6
          %v1913 = vrot.slane %v1902, 6
          %v1914 = vsel %vm1700, %v1912, %v1913
          %v1915 = vrot.slane %v1901, 6
          %v1916 = vrot.slane %v1903, 6
          %v1917 = vsel %vm1700, %v1915, %v1916
          %v1918 = vrot.slane %v1904, 6
          %v1919 = vsel %vm1700, %v1913, %v1918
          %v1920 = vrot.slane %v1905, 6
          %v1921 = vsel %vm1700, %v1916, %v1920
          %1922 = vrot.lane.b32.xlu0 %v1914, 122
          %v1923 = vpop.permute.xlu0 %1922
          %1924 = vrot.lane.b32.xlu0 %v1917, 122
          %v1925 = vpop.permute.xlu0 %1924
          %1926 = vrot.lane.b32.xlu0 %v1919, 122
          %v1927 = vpop.permute.xlu0 %1926
          %1928 = vrot.lane.b32.xlu0 %v1921, 122
          %v1929 = vpop.permute.xlu0 %1928
          %v1930 = vsel %vm458, %v1923, %v1925
          %v1931 = vsel %vm458, %v1927, %v1929
          %v1934 = vadd.f32 %v1897, %v1930
          %v1935 = vadd.f32 %v1898, %v1931
          %v1936 = vxor.u32 %v1934, 2147483648
          %v1937 = vxor.u32 %v1935, 2147483648
          %v1938 = vmul.f32 %v1936, 1.442695
          %v1939 = vpow.pop %v1938
          %v1940 = vmul.f32 %v1937, 1.442695
          %v1941 = vpow.pop %v1940
          %v1942 = vadd.f32 %v1939, 1.0
          %v1943 = vadd.f32 %v1941, 1.0
          %v1944 = vrcp.pop %v1942
          %v1945 = vmul.f32 1.0, %v1944
          %v1946 = vrcp.pop %v1943
          %v1947 = vmul.f32 1.0, %v1946
          %1948 = vst [vmem:[%s190] sm:$0xff] %v1945
          %1949 = vst [vmem:[%s190 + $0x8] sm:$0xff] %v1947
        $region48: #{tpu_custom_call.1} parent=27 // pred_fallthru
          _
        %s1950 = sand.u32 %s89, 1
        %s1951 = scalar_lea.sflag [#allocation6], %s1950
        %s1952 = sand.u32 %s89, 1
        %s1953 = smul.addr %s1952, 16
        %s1954 = scalar_lea.vmem [#allocation9], %s1953
        // Predicated region
        $region49: #{tpu_custom_call.1} parent=27 // pred_check
          %p1955 = pneg %p99
        $region50: #{tpu_custom_call.1} parent=27 // pred_check_branch
          %1957 = sbr.rel (%p1955) target = $region52
        $region51: #{tpu_custom_call.1} parent=27 // pred_region
          %s1959 = ssub.s32 256, 256
          %1960 = vsyncadd %s1951, %s1959
          %s1961 = smul.addr %s24, 2
          %s1962 = smul.addr %s1961, 128
          %s1963 = scalar_lea.hbm %s2, %s1962
          %s1964 = sshll.u32 %s1954, 4
          %s1965 = int_to_ptr.vmem [resolvable:$true] %s1964
          %1970 = dma.vmem_to_hbm [thread:$0]  %s1965, 256, %s1963, %s1951, 128, 128, 8
        $region52: #{tpu_custom_call.1} parent=27 // pred_fallthru
          _
      $region28: #{tpu_custom_call.1} parent=5 // pred_fallthru
        _
      %p1971 = scmp.le.s32.totalorder 2, %s15
      // Predicated region
      $region53: #{tpu_custom_call.1} parent=5 // pred_check
        %p1972 = pneg %p1971
      $region54: #{tpu_custom_call.1} parent=5 // pred_check_branch
        %1974 = sbr.rel (%p1972) target = $region56
      $region55: #{tpu_custom_call.1} parent=5 // pred_region
        %s1975 = ssub.s32 %s15, 2
        // Predicated region
        $region57: #{tpu_custom_call.1} parent=55 // pred_check
          %p1976 = pneg %p105
        $region58: #{tpu_custom_call.1} parent=55 // pred_check_branch
          %1978 = sbr.rel (%p1976) target = $region60
        $region59: #{tpu_custom_call.1} parent=55 // pred_region
          %s1979 = sand.u32 %s90, 1
          %s1980 = scalar_lea.sflag [#allocation6], %s1979
          %s1981 = sand.u32 %s90, 1
          %s1982 = smul.addr %s1981, 16
          %s1983 = scalar_lea.vmem [#allocation9], %s1982
          %1984 = dma.done %s1980, 256
        $region60: #{tpu_custom_call.1} parent=55 // pred_fallthru
          _
      $region56: #{tpu_custom_call.1} parent=5 // pred_fallthru
        _
    $region6: #{tpu_custom_call.1} parent=1 // loop_footer
      %s19 = sadd.s32 1, %s15
    $region7: #{tpu_custom_call.1} parent=1 // loop_footer_branch
      %14 = sbr.rel target = $region3
    $region8: #{tpu_custom_call.1} parent=1 // loop_exit
      _
    %1985 = vsyncpa [#allocation5], 1
    %s1986 = scalar_lea.sflag [#allocation5], 1
    %1987 = vsyncpa %s1986, 1
    %1988 = vsyncpa [#allocation6], 1
    %s1989 = scalar_lea.sflag [#allocation6], 1
    %1990 = vsyncpa %s1989, 1
    %1991 = vsyncpa [#allocation7], 1
    %s1992 = scalar_lea.sflag [#allocation7], 1
    %1993 = vsyncpa %s1992, 1

</llo_original>
